<compile_context>
chip_gen: v7x
topology: tpu7x:2x2x1
jax: 0.10.0
libtpu: 0.0.40
codegen_flags: <defaults>
</compile_context>

<pallas_src>
import math
import functools

import jax
import jax.numpy as jnp
from jax.experimental import pallas as pl
from jax.experimental.pallas import tpu as pltpu


def _self_attention_kernel(xq_ref, xkv_ref, wq_ref, bq_ref, wkv_ref, bkv_ref,
                           wp_ref, bp_ref, o_ref, kv_ref, y_ref, *, n_head):
    # xq_ref : (1, tq, C) bf16  -- query rows for this tile
    # xkv_ref: (1, T,  C) bf16  -- full sequence (for K/V; same block for all qi)
    # wq_ref : (C, C)   bf16 ; bq_ref : (1, C)   f32
    # wkv_ref: (C, 2C)  bf16 ; bkv_ref: (1, 2C)  f32   (K and V fused)
    # wp_ref : (C, C)   bf16 ; bp_ref : (1, C)   f32
    # o_ref  : (1, tq, C) f32
    # kv_ref : (T, 2C) bf16 VMEM scratch (K/V projections, cached per batch)
    # y_ref  : (tq, C) bf16 VMEM scratch (concatenated head outputs)
    qi = pl.program_id(1)

    # Compute the full-sequence K/V projection only once per batch element
    # (qi is the innermost grid axis, so qi == 0 opens every batch element).
    @pl.when(qi == 0)
    def _():
        kv = jnp.dot(xkv_ref[0], wkv_ref[...],
                     preferred_element_type=jnp.float32) + bkv_ref[0]   # (T, 2C) f32
        kv_ref[...] = kv.astype(jnp.bfloat16)

    xq = xq_ref[0]                                    # (tq, C) bf16
    C = xq.shape[1]
    D = C // n_head
    scale = 1.0 / math.sqrt(D)

    # Query projection for this tile (MXU, bf16 inputs, f32 accumulate).
    q = jnp.dot(xq, wq_ref[...], preferred_element_type=jnp.float32) + bq_ref[0]   # (tq, C)

    # Per-head attention.  Heads are static contiguous D-chunks; each head's
    # output is stored straight into the scratch (no concatenate), so only one
    # (tq, T) attention tile is live at a time.
    for h in range(n_head):
        qh = q[:, h * D:(h + 1) * D].astype(jnp.bfloat16)        # (tq, D)
        kh = kv_ref[:, h * D:(h + 1) * D]                        # (T, D) bf16
        vh = kv_ref[:, C + h * D:C + (h + 1) * D]                # (T, D) bf16

        # q @ k^T via dot_general (contract last dim of both; no explicit .T)
        att = jax.lax.dot_general(
            qh, kh, (((1,), (1,)), ((), ())),
            preferred_element_type=jnp.float32) * scale           # (tq, T) f32

        # numerically-stable softmax over the last axis (f32)
        m = jnp.max(att, axis=-1, keepdims=True)
        e = jnp.exp(att - m)
        s = jnp.sum(e, axis=-1, keepdims=True)
        p = e * pl.reciprocal(s, approx=True)

        yh = jnp.dot(p.astype(jnp.bfloat16), vh,
                     preferred_element_type=jnp.float32)           # (tq, D) f32
        y_ref[:, h * D:(h + 1) * D] = yh.astype(jnp.bfloat16)

    # Output projection on the assembled (tq, C) head outputs.
    out = jnp.dot(y_ref[...], wp_ref[...],
                  preferred_element_type=jnp.float32) + bp_ref[0]
    o_ref[0] = out.astype(o_ref.dtype)


def _pick_tq(T):
    """Largest query-tile size (multiple of 8, <=256) that divides T."""
    for cand in (256, 128, 64, 32, 16, 8):
        if T % cand == 0:
            return cand
    return T  # fall back to the full (always legal) block


def self_attention_pallas(x, params, n_head):
    """x: (B, T, C) float32.  params: dict of (in,out) weights and (C,) biases."""
    B, T, C = x.shape
    assert C % n_head == 0
    tq = _pick_tq(T)
    n_qt = T // tq

    # Cast matmul operands to bf16 once in the wrapper (halves HBM/VMEM
    # traffic for x and weights); biases stay f32 and are added post-MXU.
    xb = x.astype(jnp.bfloat16)
    wq = params["wq"].astype(jnp.bfloat16)
    wkv = jnp.concatenate([params["wk"], params["wv"]], axis=1).astype(jnp.bfloat16)
    wp = params["wp"].astype(jnp.bfloat16)
    bq = params["bq"].reshape(1, C).astype(jnp.float32)
    bkv = jnp.concatenate([params["bk"], params["bv"]]).reshape(1, 2 * C).astype(jnp.float32)
    bp = params["bp"].reshape(1, C).astype(jnp.float32)

    kernel = functools.partial(_self_attention_kernel, n_head=n_head)

    return pl.pallas_call(
        kernel,
        out_shape=jax.ShapeDtypeStruct((B, T, C), x.dtype),
        grid_spec=pltpu.PrefetchScalarGridSpec(
            num_scalar_prefetch=0,
            grid=(B, n_qt),
            in_specs=[
                pl.BlockSpec((1, tq, C), lambda b, qi: (b, qi, 0)),   # x (query tile)
                pl.BlockSpec((1, T, C), lambda b, qi: (b, 0, 0)),     # x (full, for K/V)
                pl.BlockSpec((C, C), lambda b, qi: (0, 0)),           # wq
                pl.BlockSpec((1, C), lambda b, qi: (0, 0)),           # bq
                pl.BlockSpec((C, 2 * C), lambda b, qi: (0, 0)),       # wkv (fused)
                pl.BlockSpec((1, 2 * C), lambda b, qi: (0, 0)),       # bkv (fused)
                pl.BlockSpec((C, C), lambda b, qi: (0, 0)),           # wp
                pl.BlockSpec((1, C), lambda b, qi: (0, 0)),           # bp
            ],
            out_specs=pl.BlockSpec((1, tq, C), lambda b, qi: (b, qi, 0)),
            scratch_shapes=[
                pltpu.VMEM((T, 2 * C), jnp.bfloat16),                 # cached K/V
                pltpu.VMEM((tq, C), jnp.bfloat16),                    # head outputs
            ],
        ),
        compiler_params=pltpu.CompilerParams(
            # qi axis carries the K/V scratch across iterations -> "arbitrary"
            dimension_semantics=("parallel", "arbitrary")),
    )(xb, xb, wq, bq, wkv, bkv, wp, bp)


def self_attention_ref(x, params, n_head):
    """Pure-JAX f32 reference matching the PyTorch forward (eval mode)."""
    B, T, C = x.shape
    D = C // n_head

    def lin(x, w, b):
        return x @ w + b

    q = lin(x, params["wq"], params["bq"]).reshape(B, T, n_head, D).transpose(0, 2, 1, 3)
    k = lin(x, params["wk"], params["bk"]).reshape(B, T, n_head, D).transpose(0, 2, 1, 3)
    v = lin(x, params["wv"], params["bv"]).reshape(B, T, n_head, D).transpose(0, 2, 1, 3)
    att = jnp.einsum("bhqd,bhkd->bhqk", q, k) * (1.0 / math.sqrt(D))
    att = jax.nn.softmax(att, axis=-1)
    y = jnp.einsum("bhqk,bhkd->bhqd", att, v)
    y = y.transpose(0, 2, 1, 3).reshape(B, T, C)
    return lin(y, params["wp"], params["bp"])


def init_params(key, n_embd):
    """Deterministic init mimicking nn.Linear's U(-1/sqrt(in), 1/sqrt(in))."""
    bound = 1.0 / math.sqrt(n_embd)
    names = ["wq", "bq", "wk", "bk", "wv", "bv", "wp", "bp"]
    keys = jax.random.split(key, len(names))
    params = {}
    for name, k in zip(names, keys):
        shape = (n_embd, n_embd) if name.startswith("w") else (n_embd,)
        params[name] = jax.random.uniform(
            k, shape, dtype=jnp.float32, minval=-bound, maxval=bound)
    return params


if __name__ == "__main__":
    B, T, C = 2, 8, 32
    n_head = 4

    key = jax.random.PRNGKey(0)
    kx, kp = jax.random.split(key)
    x = jax.random.normal(kx, (B, T, C), dtype=jnp.float32)
    params = init_params(kp, C)

    out = self_attention_pallas(x, params, n_head)
    out = jax.block_until_ready(out)

    ref = self_attention_ref(x, params, n_head)
    assert out.shape == (B, T, C)
    # bf16 MXU operands + approx reciprocal loosen the tolerance vs. the f32 ref
    assert jnp.allclose(out, ref, atol=2e-2, rtol=2e-2), \
        float(jnp.max(jnp.abs(out - ref)))

    print("KERNEL_OK")
</pallas_src>

<mosaic_0001>
module attributes {stable_mosaic.version = 11 : i64} {
  func.func @_self_attention_kernel(%arg0: i32, %arg1: i32, %arg2: memref<1x8x32xbf16, #tpu.memory_space<vmem>>, %arg3: memref<1x8x32xbf16, #tpu.memory_space<vmem>>, %arg4: memref<32x32xbf16, #tpu.memory_space<vmem>>, %arg5: memref<1x32xf32, #tpu.memory_space<vmem>>, %arg6: memref<32x64xbf16, #tpu.memory_space<vmem>>, %arg7: memref<1x64xf32, #tpu.memory_space<vmem>>, %arg8: memref<32x32xbf16, #tpu.memory_space<vmem>>, %arg9: memref<1x32xf32, #tpu.memory_space<vmem>>, %arg10: memref<1x8x32xf32, #tpu.memory_space<vmem>>, %arg11: memref<8x64xbf16, #tpu.memory_space<vmem>>, %arg12: memref<8x32xbf16, #tpu.memory_space<vmem>>) attributes {dimension_semantics = [#tpu.dimension_semantics<parallel>, #tpu.dimension_semantics<arbitrary>], iteration_bounds = array<i64: 2, 1>, scalar_prefetch = 0 : i64, scratch_operands = 2 : i64, tpu.core_type = #tpu.core_type<tc>, window_params = [{transform_indices = @transform_0, window_bounds = array<i64: 1, 8, 32>}, {transform_indices = @transform_1, window_bounds = array<i64: 1, 8, 32>}, {pipeline_mode = #tpu.pipeline_mode<synchronous>, transform_indices = @transform_2, window_bounds = array<i64: 32, 32>}, {pipeline_mode = #tpu.pipeline_mode<synchronous>, transform_indices = @transform_3, window_bounds = array<i64: 1, 32>}, {pipeline_mode = #tpu.pipeline_mode<synchronous>, transform_indices = @transform_4, window_bounds = array<i64: 32, 64>}, {pipeline_mode = #tpu.pipeline_mode<synchronous>, transform_indices = @transform_5, window_bounds = array<i64: 1, 64>}, {pipeline_mode = #tpu.pipeline_mode<synchronous>, transform_indices = @transform_6, window_bounds = array<i64: 32, 32>}, {pipeline_mode = #tpu.pipeline_mode<synchronous>, transform_indices = @transform_7, window_bounds = array<i64: 1, 32>}, {transform_indices = @transform_8, window_bounds = array<i64: 1, 8, 32>}]} {
    %c0_i32 = arith.constant 0 : i32
    %0 = arith.cmpi eq, %arg1, %c0_i32 : i32
    %1 = arith.extui %0 : i1 to i32
    %c0_i32_0 = arith.constant 0 : i32
    %2 = arith.cmpi ne, %1, %c0_i32_0 : i32
    scf.if %2 {
      %c0_54 = arith.constant 0 : index
      %c0_55 = arith.constant 0 : index
      %c0_56 = arith.constant 0 : index
      %107 = vector.load %arg3[%c0_54, %c0_55, %c0_56] : memref<1x8x32xbf16, #tpu.memory_space<vmem>>, vector<1x8x32xbf16>
      %108 = vector.shape_cast %107 : vector<1x8x32xbf16> to vector<8x32xbf16>
      %c0_57 = arith.constant 0 : index
      %c0_58 = arith.constant 0 : index
      %109 = vector.load %arg6[%c0_57, %c0_58] : memref<32x64xbf16, #tpu.memory_space<vmem>>, vector<32x64xbf16>
      %cst_59 = arith.constant dense<0.000000e+00> : vector<8x64xf32>
      %110 = tpu.matmul %108, %109, %cst_59 {dimension_numbers = #tpu.dot_dimension_numbers<[1], [0], [0], [1], [0, 0, 1, 1], [], []>} : vector<8x32xbf16>, vector<32x64xbf16>, vector<8x64xf32> -> vector<8x64xf32>
      %c0_60 = arith.constant 0 : index
      %c0_61 = arith.constant 0 : index
      %111 = vector.load %arg7[%c0_60, %c0_61] : memref<1x64xf32, #tpu.memory_space<vmem>>, vector<1x64xf32>
      %112 = vector.shape_cast %111 : vector<1x64xf32> to vector<64xf32>
      %113 = vector.shape_cast %112 : vector<64xf32> to vector<1x64xf32>
      %114 = vector.broadcast %113 : vector<1x64xf32> to vector<8x64xf32>
      %115 = arith.addf %110, %114 : vector<8x64xf32>
      %116 = arith.truncf %115 : vector<8x64xf32> to vector<8x64xbf16>
      %c0_62 = arith.constant 0 : index
      %c0_63 = arith.constant 0 : index
      %117 = vector.load %arg11[%c0_62, %c0_63] : memref<8x64xbf16, #tpu.memory_space<vmem>>, vector<8x64xbf16>
      tpu.vector_store %arg11[%c0_62, %c0_63], %116 {strides = array<i32>} : memref<8x64xbf16, #tpu.memory_space<vmem>>, vector<8x64xbf16>,
    } else {
    }
    %c0 = arith.constant 0 : index
    %c0_1 = arith.constant 0 : index
    %c0_2 = arith.constant 0 : index
    %3 = vector.load %arg2[%c0, %c0_1, %c0_2] : memref<1x8x32xbf16, #tpu.memory_space<vmem>>, vector<1x8x32xbf16>
    %4 = vector.shape_cast %3 : vector<1x8x32xbf16> to vector<8x32xbf16>
    %c0_3 = arith.constant 0 : index
    %c0_4 = arith.constant 0 : index
    %5 = vector.load %arg4[%c0_3, %c0_4] : memref<32x32xbf16, #tpu.memory_space<vmem>>, vector<32x32xbf16>
    %cst = arith.constant dense<0.000000e+00> : vector<8x32xf32>
    %6 = tpu.matmul %4, %5, %cst {dimension_numbers = #tpu.dot_dimension_numbers<[1], [0], [0], [1], [0, 0, 1, 1], [], []>} : vector<8x32xbf16>, vector<32x32xbf16>, vector<8x32xf32> -> vector<8x32xf32>
    %c0_5 = arith.constant 0 : index
    %c0_6 = arith.constant 0 : index
    %7 = vector.load %arg5[%c0_5, %c0_6] : memref<1x32xf32, #tpu.memory_space<vmem>>, vector<1x32xf32>
    %8 = vector.shape_cast %7 : vector<1x32xf32> to vector<32xf32>
    %9 = vector.shape_cast %8 : vector<32xf32> to vector<1x32xf32>
    %10 = vector.broadcast %9 : vector<1x32xf32> to vector<8x32xf32>
    %11 = arith.addf %6, %10 : vector<8x32xf32>
    %12 = vector.extract_strided_slice %11 {offsets = [0, 0], sizes = [8, 8], strides = [1, 1]} : vector<8x32xf32> to vector<8x8xf32>
    %13 = arith.truncf %12 : vector<8x8xf32> to vector<8x8xbf16>
    %c0_7 = arith.constant 0 : index
    %c0_8 = arith.constant 0 : index
    %14 = vector.load %arg11[%c0_7, %c0_8] : memref<8x64xbf16, #tpu.memory_space<vmem>>, vector<8x8xbf16>
    %c0_9 = arith.constant 0 : index
    %c32 = arith.constant 32 : index
    %15 = vector.load %arg11[%c0_9, %c32] : memref<8x64xbf16, #tpu.memory_space<vmem>>, vector<8x8xbf16>
    %cst_10 = arith.constant dense<0.000000e+00> : vector<8x8xf32>
    %16 = tpu.matmul %13, %14, %cst_10 {dimension_numbers = #tpu.dot_dimension_numbers<[1], [1], [0], [0], [0, 0, 1, 0], [], []>} : vector<8x8xbf16>, vector<8x8xbf16>, vector<8x8xf32> -> vector<8x8xf32>
    %cst_11 = arith.constant 0.353553385 : f32
    %17 = vector.broadcast %cst_11 : f32 to vector<8x8xf32>
    %18 = arith.mulf %16, %17 : vector<8x8xf32>
    %cst_12 = arith.constant dense<0xFF800000> : vector<8xf32>
    %19 = vector.multi_reduction <maximumf>, %18, %cst_12 [1] : vector<8x8xf32> to vector<8xf32>
    %20 = vector.shape_cast %19 : vector<8xf32> to vector<8x1xf32>
    %21 = vector.broadcast %20 : vector<8x1xf32> to vector<8x8xf32>
    %22 = arith.subf %18, %21 : vector<8x8xf32>
    %23 = math.exp %22 : vector<8x8xf32>
    %cst_13 = arith.constant dense<0.000000e+00> : vector<8xf32>
    %24 = vector.multi_reduction <add>, %23, %cst_13 [1] : vector<8x8xf32> to vector<8xf32>
    %25 = vector.shape_cast %24 : vector<8xf32> to vector<8x1xf32>
    %26 = tpu.reciprocal %25 {approx = true} : vector<8x1xf32> -> vector<8x1xf32>
    %27 = vector.broadcast %26 : vector<8x1xf32> to vector<8x8xf32>
    %28 = arith.mulf %23, %27 : vector<8x8xf32>
    %29 = arith.truncf %28 : vector<8x8xf32> to vector<8x8xbf16>
    %cst_14 = arith.constant dense<0.000000e+00> : vector<8x8xf32>
    %30 = tpu.matmul %29, %15, %cst_14 {dimension_numbers = #tpu.dot_dimension_numbers<[1], [0], [0], [1], [0, 0, 1, 1], [], []>} : vector<8x8xbf16>, vector<8x8xbf16>, vector<8x8xf32> -> vector<8x8xf32>
    %31 = arith.truncf %30 : vector<8x8xf32> to vector<8x8xbf16>
    %c0_15 = arith.constant 0 : index
    %c0_16 = arith.constant 0 : index
    %32 = vector.load %arg12[%c0_15, %c0_16] : memref<8x32xbf16, #tpu.memory_space<vmem>>, vector<8x8xbf16>
    tpu.vector_store %arg12[%c0_15, %c0_16], %31 {strides = array<i32>} : memref<8x32xbf16, #tpu.memory_space<vmem>>, vector<8x8xbf16>,
    %33 = vector.extract_strided_slice %11 {offsets = [0, 8], sizes = [8, 8], strides = [1, 1]} : vector<8x32xf32> to vector<8x8xf32>
    %34 = arith.truncf %33 : vector<8x8xf32> to vector<8x8xbf16>
    %c0_17 = arith.constant 0 : index
    %c8 = arith.constant 8 : index
    %35 = vector.load %arg11[%c0_17, %c8] : memref<8x64xbf16, #tpu.memory_space<vmem>>, vector<8x8xbf16>
    %c0_18 = arith.constant 0 : index
    %c40 = arith.constant 40 : index
    %36 = vector.load %arg11[%c0_18, %c40] : memref<8x64xbf16, #tpu.memory_space<vmem>>, vector<8x8xbf16>
    %cst_19 = arith.constant dense<0.000000e+00> : vector<8x8xf32>
    %37 = tpu.matmul %34, %35, %cst_19 {dimension_numbers = #tpu.dot_dimension_numbers<[1], [1], [0], [0], [0, 0, 1, 0], [], []>} : vector<8x8xbf16>, vector<8x8xbf16>, vector<8x8xf32> -> vector<8x8xf32>
    %cst_20 = arith.constant 0.353553385 : f32
    %38 = vector.broadcast %cst_20 : f32 to vector<8x8xf32>
    %39 = arith.mulf %37, %38 : vector<8x8xf32>
    %cst_21 = arith.constant dense<0xFF800000> : vector<8xf32>
    %40 = vector.multi_reduction <maximumf>, %39, %cst_21 [1] : vector<8x8xf32> to vector<8xf32>
    %41 = vector.shape_cast %40 : vector<8xf32> to vector<8x1xf32>
    %42 = vector.broadcast %41 : vector<8x1xf32> to vector<8x8xf32>
    %43 = arith.subf %39, %42 : vector<8x8xf32>
    %44 = math.exp %43 : vector<8x8xf32>
    %cst_22 = arith.constant dense<0.000000e+00> : vector<8xf32>
    %45 = vector.multi_reduction <add>, %44, %cst_22 [1] : vector<8x8xf32> to vector<8xf32>
    %46 = vector.shape_cast %45 : vector<8xf32> to vector<8x1xf32>
    %47 = tpu.reciprocal %46 {approx = true} : vector<8x1xf32> -> vector<8x1xf32>
    %48 = vector.broadcast %47 : vector<8x1xf32> to vector<8x8xf32>
    %49 = arith.mulf %44, %48 : vector<8x8xf32>
    %50 = arith.truncf %49 : vector<8x8xf32> to vector<8x8xbf16>
    %cst_23 = arith.constant dense<0.000000e+00> : vector<8x8xf32>
    %51 = tpu.matmul %50, %36, %cst_23 {dimension_numbers = #tpu.dot_dimension_numbers<[1], [0], [0], [1], [0, 0, 1, 1], [], []>} : vector<8x8xbf16>, vector<8x8xbf16>, vector<8x8xf32> -> vector<8x8xf32>
    %52 = arith.truncf %51 : vector<8x8xf32> to vector<8x8xbf16>
    %c0_24 = arith.constant 0 : index
    %c8_25 = arith.constant 8 : index
    %53 = vector.load %arg12[%c0_24, %c8_25] : memref<8x32xbf16, #tpu.memory_space<vmem>>, vector<8x8xbf16>
    tpu.vector_store %arg12[%c0_24, %c8_25], %52 {strides = array<i32>} : memref<8x32xbf16, #tpu.memory_space<vmem>>, vector<8x8xbf16>,
    %54 = vector.extract_strided_slice %11 {offsets = [0, 16], sizes = [8, 8], strides = [1, 1]} : vector<8x32xf32> to vector<8x8xf32>
    %55 = arith.truncf %54 : vector<8x8xf32> to vector<8x8xbf16>
    %c0_26 = arith.constant 0 : index
    %c16 = arith.constant 16 : index
    %56 = vector.load %arg11[%c0_26, %c16] : memref<8x64xbf16, #tpu.memory_space<vmem>>, vector<8x8xbf16>
    %c0_27 = arith.constant 0 : index
    %c48 = arith.constant 48 : index
    %57 = vector.load %arg11[%c0_27, %c48] : memref<8x64xbf16, #tpu.memory_space<vmem>>, vector<8x8xbf16>
    %cst_28 = arith.constant dense<0.000000e+00> : vector<8x8xf32>
    %58 = tpu.matmul %55, %56, %cst_28 {dimension_numbers = #tpu.dot_dimension_numbers<[1], [1], [0], [0], [0, 0, 1, 0], [], []>} : vector<8x8xbf16>, vector<8x8xbf16>, vector<8x8xf32> -> vector<8x8xf32>
    %cst_29 = arith.constant 0.353553385 : f32
    %59 = vector.broadcast %cst_29 : f32 to vector<8x8xf32>
    %60 = arith.mulf %58, %59 : vector<8x8xf32>
    %cst_30 = arith.constant dense<0xFF800000> : vector<8xf32>
    %61 = vector.multi_reduction <maximumf>, %60, %cst_30 [1] : vector<8x8xf32> to vector<8xf32>
    %62 = vector.shape_cast %61 : vector<8xf32> to vector<8x1xf32>
    %63 = vector.broadcast %62 : vector<8x1xf32> to vector<8x8xf32>
    %64 = arith.subf %60, %63 : vector<8x8xf32>
    %65 = math.exp %64 : vector<8x8xf32>
    %cst_31 = arith.constant dense<0.000000e+00> : vector<8xf32>
    %66 = vector.multi_reduction <add>, %65, %cst_31 [1] : vector<8x8xf32> to vector<8xf32>
    %67 = vector.shape_cast %66 : vector<8xf32> to vector<8x1xf32>
    %68 = tpu.reciprocal %67 {approx = true} : vector<8x1xf32> -> vector<8x1xf32>
    %69 = vector.broadcast %68 : vector<8x1xf32> to vector<8x8xf32>
    %70 = arith.mulf %65, %69 : vector<8x8xf32>
    %71 = arith.truncf %70 : vector<8x8xf32> to vector<8x8xbf16>
    %cst_32 = arith.constant dense<0.000000e+00> : vector<8x8xf32>
    %72 = tpu.matmul %71, %57, %cst_32 {dimension_numbers = #tpu.dot_dimension_numbers<[1], [0], [0], [1], [0, 0, 1, 1], [], []>} : vector<8x8xbf16>, vector<8x8xbf16>, vector<8x8xf32> -> vector<8x8xf32>
    %73 = arith.truncf %72 : vector<8x8xf32> to vector<8x8xbf16>
    %c0_33 = arith.constant 0 : index
    %c16_34 = arith.constant 16 : index
    %74 = vector.load %arg12[%c0_33, %c16_34] : memref<8x32xbf16, #tpu.memory_space<vmem>>, vector<8x8xbf16>
    tpu.vector_store %arg12[%c0_33, %c16_34], %73 {strides = array<i32>} : memref<8x32xbf16, #tpu.memory_space<vmem>>, vector<8x8xbf16>,
    %75 = vector.extract_strided_slice %11 {offsets = [0, 24], sizes = [8, 8], strides = [1, 1]} : vector<8x32xf32> to vector<8x8xf32>
    %76 = arith.truncf %75 : vector<8x8xf32> to vector<8x8xbf16>
    %c0_35 = arith.constant 0 : index
    %c24 = arith.constant 24 : index
    %77 = vector.load %arg11[%c0_35, %c24] : memref<8x64xbf16, #tpu.memory_space<vmem>>, vector<8x8xbf16>
    %c0_36 = arith.constant 0 : index
    %c56 = arith.constant 56 : index
    %78 = vector.load %arg11[%c0_36, %c56] : memref<8x64xbf16, #tpu.memory_space<vmem>>, vector<8x8xbf16>
    %cst_37 = arith.constant dense<0.000000e+00> : vector<8x8xf32>
    %79 = tpu.matmul %76, %77, %cst_37 {dimension_numbers = #tpu.dot_dimension_numbers<[1], [1], [0], [0], [0, 0, 1, 0], [], []>} : vector<8x8xbf16>, vector<8x8xbf16>, vector<8x8xf32> -> vector<8x8xf32>
    %cst_38 = arith.constant 0.353553385 : f32
    %80 = vector.broadcast %cst_38 : f32 to vector<8x8xf32>
    %81 = arith.mulf %79, %80 : vector<8x8xf32>
    %cst_39 = arith.constant dense<0xFF800000> : vector<8xf32>
    %82 = vector.multi_reduction <maximumf>, %81, %cst_39 [1] : vector<8x8xf32> to vector<8xf32>
    %83 = vector.shape_cast %82 : vector<8xf32> to vector<8x1xf32>
    %84 = vector.broadcast %83 : vector<8x1xf32> to vector<8x8xf32>
    %85 = arith.subf %81, %84 : vector<8x8xf32>
    %86 = math.exp %85 : vector<8x8xf32>
    %cst_40 = arith.constant dense<0.000000e+00> : vector<8xf32>
    %87 = vector.multi_reduction <add>, %86, %cst_40 [1] : vector<8x8xf32> to vector<8xf32>
    %88 = vector.shape_cast %87 : vector<8xf32> to vector<8x1xf32>
    %89 = tpu.reciprocal %88 {approx = true} : vector<8x1xf32> -> vector<8x1xf32>
    %90 = vector.broadcast %89 : vector<8x1xf32> to vector<8x8xf32>
    %91 = arith.mulf %86, %90 : vector<8x8xf32>
    %92 = arith.truncf %91 : vector<8x8xf32> to vector<8x8xbf16>
    %cst_41 = arith.constant dense<0.000000e+00> : vector<8x8xf32>
    %93 = tpu.matmul %92, %78, %cst_41 {dimension_numbers = #tpu.dot_dimension_numbers<[1], [0], [0], [1], [0, 0, 1, 1], [], []>} : vector<8x8xbf16>, vector<8x8xbf16>, vector<8x8xf32> -> vector<8x8xf32>
    %94 = arith.truncf %93 : vector<8x8xf32> to vector<8x8xbf16>
    %c0_42 = arith.constant 0 : index
    %c24_43 = arith.constant 24 : index
    %95 = vector.load %arg12[%c0_42, %c24_43] : memref<8x32xbf16, #tpu.memory_space<vmem>>, vector<8x8xbf16>
    tpu.vector_store %arg12[%c0_42, %c24_43], %94 {strides = array<i32>} : memref<8x32xbf16, #tpu.memory_space<vmem>>, vector<8x8xbf16>,
    %c0_44 = arith.constant 0 : index
    %c0_45 = arith.constant 0 : index
    %96 = vector.load %arg12[%c0_44, %c0_45] : memref<8x32xbf16, #tpu.memory_space<vmem>>, vector<8x32xbf16>
    %c0_46 = arith.constant 0 : index
    %c0_47 = arith.constant 0 : index
    %97 = vector.load %arg8[%c0_46, %c0_47] : memref<32x32xbf16, #tpu.memory_space<vmem>>, vector<32x32xbf16>
    %cst_48 = arith.constant dense<0.000000e+00> : vector<8x32xf32>
    %98 = tpu.matmul %96, %97, %cst_48 {dimension_numbers = #tpu.dot_dimension_numbers<[1], [0], [0], [1], [0, 0, 1, 1], [], []>} : vector<8x32xbf16>, vector<32x32xbf16>, vector<8x32xf32> -> vector<8x32xf32>
    %c0_49 = arith.constant 0 : index
    %c0_50 = arith.constant 0 : index
    %99 = vector.load %arg9[%c0_49, %c0_50] : memref<1x32xf32, #tpu.memory_space<vmem>>, vector<1x32xf32>
    %100 = vector.shape_cast %99 : vector<1x32xf32> to vector<32xf32>
    %101 = vector.shape_cast %100 : vector<32xf32> to vector<1x32xf32>
    %102 = vector.broadcast %101 : vector<1x32xf32> to vector<8x32xf32>
    %103 = arith.addf %98, %102 : vector<8x32xf32>
    %c0_51 = arith.constant 0 : index
    %c0_52 = arith.constant 0 : index
    %c0_53 = arith.constant 0 : index
    %104 = vector.load %arg10[%c0_51, %c0_52, %c0_53] : memref<1x8x32xf32, #tpu.memory_space<vmem>>, vector<1x8x32xf32>
    %105 = vector.shape_cast %104 : vector<1x8x32xf32> to vector<8x32xf32>
    %106 = vector.shape_cast %103 : vector<8x32xf32> to vector<1x8x32xf32>
    tpu.vector_store %arg10[%c0_51, %c0_52, %c0_53], %106 {strides = array<i32>} : memref<1x8x32xf32, #tpu.memory_space<vmem>>, vector<1x8x32xf32>,
    return
  }
  func.func @transform_0(%arg0: i32, %arg1: i32) -> (i32, i32, i32) {
    %c0_i32 = arith.constant 0 : i32
    %c0_i32_0 = arith.constant 0 : i32
    return %arg0, %arg1, %c0_i32 : i32, i32, i32
  }
  func.func @transform_1(%arg0: i32, %arg1: i32) -> (i32, i32, i32) {
    %c0_i32 = arith.constant 0 : i32
    %c0_i32_0 = arith.constant 0 : i32
    %c0_i32_1 = arith.constant 0 : i32
    return %arg0, %c0_i32, %c0_i32_0 : i32, i32, i32
  }
  func.func @transform_2(%arg0: i32, %arg1: i32) -> (i32, i32) {
    %c0_i32 = arith.constant 0 : i32
    %c0_i32_0 = arith.constant 0 : i32
    %c0_i32_1 = arith.constant 0 : i32
    return %c0_i32, %c0_i32_0 : i32, i32
  }
  func.func @transform_3(%arg0: i32, %arg1: i32) -> (i32, i32) {
    %c0_i32 = arith.constant 0 : i32
    %c0_i32_0 = arith.constant 0 : i32
    %c0_i32_1 = arith.constant 0 : i32
    return %c0_i32, %c0_i32_0 : i32, i32
  }
  func.func @transform_4(%arg0: i32, %arg1: i32) -> (i32, i32) {
    %c0_i32 = arith.constant 0 : i32
    %c0_i32_0 = arith.constant 0 : i32
    %c0_i32_1 = arith.constant 0 : i32
    return %c0_i32, %c0_i32_0 : i32, i32
  }
  func.func @transform_5(%arg0: i32, %arg1: i32) -> (i32, i32) {
    %c0_i32 = arith.constant 0 : i32
    %c0_i32_0 = arith.constant 0 : i32
    %c0_i32_1 = arith.constant 0 : i32
    return %c0_i32, %c0_i32_0 : i32, i32
  }
  func.func @transform_6(%arg0: i32, %arg1: i32) -> (i32, i32) {
    %c0_i32 = arith.constant 0 : i32
    %c0_i32_0 = arith.constant 0 : i32
    %c0_i32_1 = arith.constant 0 : i32
    return %c0_i32, %c0_i32_0 : i32, i32
  }
  func.func @transform_7(%arg0: i32, %arg1: i32) -> (i32, i32) {
    %c0_i32 = arith.constant 0 : i32
    %c0_i32_0 = arith.constant 0 : i32
    %c0_i32_1 = arith.constant 0 : i32
    return %c0_i32, %c0_i32_0 : i32, i32
  }
  func.func @transform_8(%arg0: i32, %arg1: i32) -> (i32, i32, i32) {
    %c0_i32 = arith.constant 0 : i32
    %c0_i32_0 = arith.constant 0 : i32
    return %arg0, %arg1, %c0_i32 : i32, i32, i32
  }
}

</mosaic_0001>

<llo_original>
// kernel: tpu_custom_call.1
$region0: #{tpu_custom_call.1}
  #allocation0 [shape = 'u32[]', space=smem, size = 0x4, offset = 0x4, fixed_abs, tag = 'smem constant byte address 0x4 - core index']
  #allocation1 [shape = 'u32[144,128]{1,0:T(1,128)}', space=vmem, size = 0x12000, scoped, tag = 'internal scratch']
  #allocation2 [shape = 'bf16[8,64]{1,0:T(8,128)(2,1)}', space=vmem, size = 0x800, scoped, tag = 'scratch operand']
  #allocation3 [shape = 'bf16[8,32]{1,0:T(8,128)(2,1)}', space=vmem, size = 0x800, scoped, tag = 'scratch operand']
  %s0 = inlined_call_operand.hbm [shape: bf16[2,8,32], index: 0, kind: input, shape index: {}]
  %s1 = inlined_call_operand.hbm [shape: bf16[2,8,32], index: 1, kind: input, shape index: {}]
  %s2 = inlined_call_operand.hbm [shape: bf16[32,32], index: 2, kind: input, shape index: {}]
  %s3 = inlined_call_operand.vmem [shape: f32[1,32], index: 3, kind: input, shape index: {}]
  %s4 = inlined_call_operand.hbm [shape: bf16[32,64], index: 4, kind: input, shape index: {}]
  %s5 = inlined_call_operand.vmem [shape: f32[1,64], index: 5, kind: input, shape index: {}]
  %s6 = inlined_call_operand.vmem [shape: bf16[32,32], index: 6, kind: input, shape index: {}]
  %s7 = inlined_call_operand.vmem [shape: f32[1,32], index: 7, kind: input, shape index: {}]
  %s8 = inlined_call_operand.hbm [shape: f32[2,8,32], index: 8, kind: output, shape index: {}]
  %s9 = sld [smem:[#allocation0]]
  $region85: #{tpu_custom_call.1} parent=0
    _
  %s11 = ssub.s32 1, %s9
  %s12 = scalar_select 0, %s11, %s9
  $region1: #{tpu_custom_call.1} parent=0
    #allocation4 [shape = 'u8[4096]{0}', space=vmem, size = 0x1000, scoped, tag = 'input window, operand 0']
    #allocation5 [shape = 's32[2]{0}', space=sflag, size = 0x8, scoped, tag = 'scoped memory for tpu_custom_call.1']
    #allocation6 [shape = 's32[2]{0}', space=sflag, size = 0x8, scoped, tag = 'scoped memory for tpu_custom_call.1']
    #allocation7 [shape = 'u8[4096]{0}', space=vmem, size = 0x1000, scoped, tag = 'input window, operand 1']
    #allocation8 [shape = 's32[2]{0}', space=sflag, size = 0x8, scoped, tag = 'scoped memory for tpu_custom_call.1']
    #allocation9 [shape = 'u8[8192]{0}', space=vmem, size = 0x2000, scoped, tag = 'input window, operand 2, single buffered']
    #allocation10 [shape = 'u8[8192]{0}', space=vmem, size = 0x2000, scoped, tag = 'input window, operand 4, single buffered']
    #allocation11 [shape = 's32[1]{0}', space=sflag, size = 0x4, scoped, tag = 'scoped memory for tpu_custom_call.1']
    #allocation12 [shape = 'u8[8192]{0}', space=vmem, size = 0x2000, scoped, tag = 'output window, operand 0']
    %13 = vsyncpa [#allocation5], 0
    %s14 = scalar_lea.sflag [#allocation5], 1
    %15 = vsyncpa %s14, 0
    %16 = vsyncpa [#allocation8], 0
    %s17 = scalar_lea.sflag [#allocation8], 1
    %18 = vsyncpa %s17, 0
    %19 = vsyncpa [#allocation11], 0
    %20 = vsyncpa [#allocation6], 0
    %s21 = scalar_lea.sflag [#allocation6], 1
    %22 = vsyncpa %s21, 0
    loop: start=0, step=1, limit=4
    $region2: #{tpu_custom_call.1} parent=1 // loop_pre_header
      _
    $region3: #{tpu_custom_call.1} parent=1 // loop_header
      %s24 = sphi 0, %s28
      %p25 = scmp.ge.s32.totalorder %s24, 4
      %s31 = sphi 0, %s43
      %s32 = sphi 0, %s39
      %s33 = sphi 0, %s31
      %s34 = sphi 0, %s32
      %s35 = sphi 0, %s33
      %s36 = sphi 0, %s34
      %s48 = sphi 0, %s50
      %s51 = sphi 0, %s48
      %s52 = sphi 0, %s51
      %s68 = sphi 0, %s52
      %s74 = sphi 0, %s76
      %s77 = sphi 0, %s74
      %s78 = sphi 0, %s77
      %s94 = sphi 0, %s78
      %s98 = sphi 0, %s98
      %s100 = sphi 0, %s98
      %s101 = sphi 0, %s100
      %s115 = sphi 0, %s101
      %s119 = sphi 0, %s119
      %s121 = sphi 0, %s119
      %s122 = sphi 0, %s121
      %s136 = sphi 0, %s122
      %s140 = sphi 0, %s140
      %s142 = sphi 0, %s140
      %s143 = sphi 0, %s142
      %s157 = sphi 0, %s143
      %s161 = sphi 0, %s161
      %s163 = sphi 0, %s161
      %s164 = sphi 0, %s163
      %s178 = sphi 0, %s164
      %s182 = sphi 0, %s182
      %s184 = sphi 0, %s182
      %s185 = sphi 0, %s184
      %s199 = sphi 0, %s185
      %s203 = sphi 0, %s203
      %s205 = sphi 0, %s203
      %s206 = sphi 0, %s205
      %s220 = sphi 0, %s206
      %s228 = sphi 0, %s230
      %s231 = sphi 0, %s228
      %s232 = sphi 0, %s231
      %s248 = sphi 0, %s232
    $region4: #{tpu_custom_call.1} parent=1 // loop_header_branch
      %27 = sbr.rel (%p25) target = $region8
    $region5: #{tpu_custom_call.1} parent=1 // loop_body
      %s29 = ssub.s32 %s24, 1
      %s30 = ssub.s32 %s24, 2
      %s37 = sadd.s32 1, %s32
      %p38 = scmp.ge.s32.totalorder %s37, 1
      %s39 = scalar_select %p38, 0, %s37
      %s40 = sadd.s32 1, %s31
      %s41 = scalar_select %p38, %s40, %s31
      %p42 = scmp.ge.s32.totalorder %s41, 2
      %s43 = scalar_select %p42, 0, %s41
      %s44 = ssub.s32 %s31, %s43
      %s45 = ssub.s32 %s32, %s39
      %s46 = sor.u32 %s44, %s45
      %p47 = scmp.eq.s32.totalorder %s46, 0
      %s49 = sadd.s32 %s48, 1
      %s50 = scalar_select %p47, %s48, %s49
      %p53 = pneg %p47
      %p54 = scmp.eq.s32.totalorder %s24, 1
      %p55 = por %p53, %p54
      %p56 = scmp.ne.s32.totalorder %s48, %s51
      %p57 = scmp.eq.s32.totalorder %s24, 0
      %p58 = por %p56, %p57
      %p59 = scmp.ne.s32.totalorder %s48, %s51
      %p60 = scmp.eq.s32.totalorder %s29, 1
      %p61 = por %p59, %p60
      %p62 = scmp.ne.s32.totalorder %s51, %s52
      %p63 = scmp.eq.s32.totalorder %s29, 0
      %p64 = por %p62, %p63
      %p65 = scmp.ne.s32.totalorder %s51, %s52
      %p66 = scmp.eq.s32.totalorder %s30, 1
      %p67 = por %p65, %p66
      %p69 = scmp.ne.s32.totalorder %s52, %s68
      %p70 = scmp.eq.s32.totalorder %s30, 0
      %p71 = por %p69, %p70
      %s72 = ssub.s32 %s31, %s43
      %p73 = scmp.eq.s32.totalorder %s72, 0
      %s75 = sadd.s32 %s74, 1
      %s76 = scalar_select %p73, %s74, %s75
      %p79 = pneg %p73
      %p80 = scmp.eq.s32.totalorder %s24, 1
      %p81 = por %p79, %p80
      %p82 = scmp.ne.s32.totalorder %s74, %s77
      %p83 = scmp.eq.s32.totalorder %s24, 0
      %p84 = por %p82, %p83
      %p85 = scmp.ne.s32.totalorder %s74, %s77
      %p86 = scmp.eq.s32.totalorder %s29, 1
      %p87 = por %p85, %p86
      %p88 = scmp.ne.s32.totalorder %s77, %s78
      %p89 = scmp.eq.s32.totalorder %s29, 0
      %p90 = por %p88, %p89
      %p91 = scmp.ne.s32.totalorder %s77, %s78
      %p92 = scmp.eq.s32.totalorder %s30, 1
      %p93 = por %p91, %p92
      %p95 = scmp.ne.s32.totalorder %s78, %s94
      %p96 = scmp.eq.s32.totalorder %s30, 0
      %p97 = por %p95, %p96
      %s99 = sadd.s32 %s98, 1
      %p102 = scmp.eq.s32.totalorder %s24, 1
      %p103 = scmp.ne.s32.totalorder %s98, %s100
      %p104 = scmp.eq.s32.totalorder %s24, 0
      %p105 = por %p103, %p104
      %p106 = scmp.ne.s32.totalorder %s98, %s100
      %p107 = scmp.eq.s32.totalorder %s29, 1
      %p108 = por %p106, %p107
      %p109 = scmp.ne.s32.totalorder %s100, %s101
      %p110 = scmp.eq.s32.totalorder %s29, 0
      %p111 = por %p109, %p110
      %p112 = scmp.ne.s32.totalorder %s100, %s101
      %p113 = scmp.eq.s32.totalorder %s30, 1
      %p114 = por %p112, %p113
      %p116 = scmp.ne.s32.totalorder %s101, %s115
      %p117 = scmp.eq.s32.totalorder %s30, 0
      %p118 = por %p116, %p117
      %s120 = sadd.s32 %s119, 1
      %p123 = scmp.eq.s32.totalorder %s24, 1
      %p124 = scmp.ne.s32.totalorder %s119, %s121
      %p125 = scmp.eq.s32.totalorder %s24, 0
      %p126 = por %p124, %p125
      %p127 = scmp.ne.s32.totalorder %s119, %s121
      %p128 = scmp.eq.s32.totalorder %s29, 1
      %p129 = por %p127, %p128
      %p130 = scmp.ne.s32.totalorder %s121, %s122
      %p131 = scmp.eq.s32.totalorder %s29, 0
      %p132 = por %p130, %p131
      %p133 = scmp.ne.s32.totalorder %s121, %s122
      %p134 = scmp.eq.s32.totalorder %s30, 1
      %p135 = por %p133, %p134
      %p137 = scmp.ne.s32.totalorder %s122, %s136
      %p138 = scmp.eq.s32.totalorder %s30, 0
      %p139 = por %p137, %p138
      %s141 = sadd.s32 %s140, 1
      %p144 = scmp.eq.s32.totalorder %s24, 1
      %p145 = scmp.ne.s32.totalorder %s140, %s142
      %p146 = scmp.eq.s32.totalorder %s24, 0
      %p147 = por %p145, %p146
      %p148 = scmp.ne.s32.totalorder %s140, %s142
      %p149 = scmp.eq.s32.totalorder %s29, 1
      %p150 = por %p148, %p149
      %p151 = scmp.ne.s32.totalorder %s142, %s143
      %p152 = scmp.eq.s32.totalorder %s29, 0
      %p153 = por %p151, %p152
      %p154 = scmp.ne.s32.totalorder %s142, %s143
      %p155 = scmp.eq.s32.totalorder %s30, 1
      %p156 = por %p154, %p155
      %p158 = scmp.ne.s32.totalorder %s143, %s157
      %p159 = scmp.eq.s32.totalorder %s30, 0
      %p160 = por %p158, %p159
      %s162 = sadd.s32 %s161, 1
      %p165 = scmp.eq.s32.totalorder %s24, 1
      %p166 = scmp.ne.s32.totalorder %s161, %s163
      %p167 = scmp.eq.s32.totalorder %s24, 0
      %p168 = por %p166, %p167
      %p169 = scmp.ne.s32.totalorder %s161, %s163
      %p170 = scmp.eq.s32.totalorder %s29, 1
      %p171 = por %p169, %p170
      %p172 = scmp.ne.s32.totalorder %s163, %s164
      %p173 = scmp.eq.s32.totalorder %s29, 0
      %p174 = por %p172, %p173
      %p175 = scmp.ne.s32.totalorder %s163, %s164
      %p176 = scmp.eq.s32.totalorder %s30, 1
      %p177 = por %p175, %p176
      %p179 = scmp.ne.s32.totalorder %s164, %s178
      %p180 = scmp.eq.s32.totalorder %s30, 0
      %p181 = por %p179, %p180
      %s183 = sadd.s32 %s182, 1
      %p186 = scmp.eq.s32.totalorder %s24, 1
      %p187 = scmp.ne.s32.totalorder %s182, %s184
      %p188 = scmp.eq.s32.totalorder %s24, 0
      %p189 = por %p187, %p188
      %p190 = scmp.ne.s32.totalorder %s182, %s184
      %p191 = scmp.eq.s32.totalorder %s29, 1
      %p192 = por %p190, %p191
      %p193 = scmp.ne.s32.totalorder %s184, %s185
      %p194 = scmp.eq.s32.totalorder %s29, 0
      %p195 = por %p193, %p194
      %p196 = scmp.ne.s32.totalorder %s184, %s185
      %p197 = scmp.eq.s32.totalorder %s30, 1
      %p198 = por %p196, %p197
      %p200 = scmp.ne.s32.totalorder %s185, %s199
      %p201 = scmp.eq.s32.totalorder %s30, 0
      %p202 = por %p200, %p201
      %s204 = sadd.s32 %s203, 1
      %p207 = scmp.eq.s32.totalorder %s24, 1
      %p208 = scmp.ne.s32.totalorder %s203, %s205
      %p209 = scmp.eq.s32.totalorder %s24, 0
      %p210 = por %p208, %p209
      %p211 = scmp.ne.s32.totalorder %s203, %s205
      %p212 = scmp.eq.s32.totalorder %s29, 1
      %p213 = por %p211, %p212
      %p214 = scmp.ne.s32.totalorder %s205, %s206
      %p215 = scmp.eq.s32.totalorder %s29, 0
      %p216 = por %p214, %p215
      %p217 = scmp.ne.s32.totalorder %s205, %s206
      %p218 = scmp.eq.s32.totalorder %s30, 1
      %p219 = por %p217, %p218
      %p221 = scmp.ne.s32.totalorder %s206, %s220
      %p222 = scmp.eq.s32.totalorder %s30, 0
      %p223 = por %p221, %p222
      %s224 = ssub.s32 %s31, %s43
      %s225 = ssub.s32 %s32, %s39
      %s226 = sor.u32 %s224, %s225
      %p227 = scmp.eq.s32.totalorder %s226, 0
      %s229 = sadd.s32 %s228, 1
      %s230 = scalar_select %p227, %s228, %s229
      %p233 = pneg %p227
      %p234 = scmp.eq.s32.totalorder %s24, 1
      %p235 = por %p233, %p234
      %p236 = scmp.ne.s32.totalorder %s228, %s231
      %p237 = scmp.eq.s32.totalorder %s24, 0
      %p238 = por %p236, %p237
      %p239 = scmp.ne.s32.totalorder %s228, %s231
      %p240 = scmp.eq.s32.totalorder %s29, 1
      %p241 = por %p239, %p240
      %p242 = scmp.ne.s32.totalorder %s231, %s232
      %p243 = scmp.eq.s32.totalorder %s29, 0
      %p244 = por %p242, %p243
      %p245 = scmp.ne.s32.totalorder %s231, %s232
      %p246 = scmp.eq.s32.totalorder %s30, 1
      %p247 = por %p245, %p246
      %p249 = scmp.ne.s32.totalorder %s232, %s248
      %p250 = scmp.eq.s32.totalorder %s30, 0
      %p251 = por %p249, %p250
      %p252 = scmp.le.s32.totalorder 1, %s24
      %p253 = scmp.lt.s32.totalorder %s24, 3
      %p254 = pnand %p252, %p253
      %p255 = pneg %p254
      // Predicated region
      $region9: #{tpu_custom_call.1} parent=5 // pred_check
        _
      $region10: #{tpu_custom_call.1} parent=5 // pred_check_branch
        %257 = sbr.rel (%p254) target = $region12
      $region11: #{tpu_custom_call.1} parent=5 // pred_region
        %s258 = ssub.s32 %s24, 1
        // Predicated region
        $region13: #{tpu_custom_call.1} parent=11 // pred_check
          %p259 = pneg %p111
        $region14: #{tpu_custom_call.1} parent=11 // pred_check_branch
          %261 = sbr.rel (%p259) target = $region16
        $region15: #{tpu_custom_call.1} parent=11 // pred_region
          %s263 = ssub.s32 256, 256
          %264 = vsyncadd [#allocation8], %s263
          %s265 = sshll.u32 [#allocation9], 4
          %s266 = int_to_ptr.vmem [resolvable:$true] %s265
          %271 = dma.hbm_to_vmem [thread:$0]  %s2, 256, %s266, [#allocation8], 64, 64, 4
        $region16: #{tpu_custom_call.1} parent=11 // pred_fallthru
          _
        // Predicated region
        $region17: #{tpu_custom_call.1} parent=11 // pred_check
          %p272 = pneg %p132
        $region18: #{tpu_custom_call.1} parent=11 // pred_check_branch
          %274 = sbr.rel (%p272) target = $region20
        $region19: #{tpu_custom_call.1} parent=11 // pred_region
          _
        $region20: #{tpu_custom_call.1} parent=11 // pred_fallthru
          _
        // Predicated region
        $region21: #{tpu_custom_call.1} parent=11 // pred_check
          %p275 = pneg %p153
        $region22: #{tpu_custom_call.1} parent=11 // pred_check_branch
          %277 = sbr.rel (%p275) target = $region24
        $region23: #{tpu_custom_call.1} parent=11 // pred_region
          %s279 = ssub.s32 256, 256
          %280 = vsyncadd [#allocation11], %s279
          %s281 = sshll.u32 [#allocation10], 4
          %s282 = int_to_ptr.vmem [resolvable:$true] %s281
          %287 = dma.hbm_to_vmem [thread:$0]  %s4, 256, %s282, [#allocation11], 64, 64, 4
        $region24: #{tpu_custom_call.1} parent=11 // pred_fallthru
          _
        // Predicated region
        $region25: #{tpu_custom_call.1} parent=11 // pred_check
          %p288 = pneg %p174
        $region26: #{tpu_custom_call.1} parent=11 // pred_check_branch
          %290 = sbr.rel (%p288) target = $region28
        $region27: #{tpu_custom_call.1} parent=11 // pred_region
          _
        $region28: #{tpu_custom_call.1} parent=11 // pred_fallthru
          _
        // Predicated region
        $region29: #{tpu_custom_call.1} parent=11 // pred_check
          %p291 = pneg %p195
        $region30: #{tpu_custom_call.1} parent=11 // pred_check_branch
          %293 = sbr.rel (%p291) target = $region32
        $region31: #{tpu_custom_call.1} parent=11 // pred_region
          _
        $region32: #{tpu_custom_call.1} parent=11 // pred_fallthru
          _
        // Predicated region
        $region33: #{tpu_custom_call.1} parent=11 // pred_check
          %p294 = pneg %p216
        $region34: #{tpu_custom_call.1} parent=11 // pred_check_branch
          %296 = sbr.rel (%p294) target = $region36
        $region35: #{tpu_custom_call.1} parent=11 // pred_region
          _
        $region36: #{tpu_custom_call.1} parent=11 // pred_fallthru
          _
      $region12: #{tpu_custom_call.1} parent=5 // pred_fallthru
        _
      %p297 = scmp.lt.s32.totalorder %s24, 2
      // Predicated region
      $region37: #{tpu_custom_call.1} parent=5 // pred_check
        %p298 = pneg %p297
      $region38: #{tpu_custom_call.1} parent=5 // pred_check_branch
        %300 = sbr.rel (%p298) target = $region40
      $region39: #{tpu_custom_call.1} parent=5 // pred_region
        // Predicated region
        $region41: #{tpu_custom_call.1} parent=39 // pred_check
          %p301 = pneg %p58
        $region42: #{tpu_custom_call.1} parent=39 // pred_check_branch
          %303 = sbr.rel (%p301) target = $region44
        $region43: #{tpu_custom_call.1} parent=39 // pred_region
          %s304 = sand.u32 %s48, 1
          %s305 = scalar_lea.sflag [#allocation5], %s304
          %s306 = sand.u32 %s48, 1
          %s307 = smul.addr %s306, 4
          %s308 = scalar_lea.vmem [#allocation4], %s307
          %s310 = ssub.s32 64, 64
          %311 = vsyncadd %s305, %s310
          %s312 = sadd.s32 %s32, %s31
          %s313 = smul.addr %s312, 64
          %s314 = scalar_lea.hbm %s0, %s313
          %s316 = sshll.u32 %s308, 4
          %s317 = int_to_ptr.vmem [resolvable:$true] %s316
          %319 = dma.hbm_to_vmem [thread:$0]  %s314, 64, %s317, %s305
        $region44: #{tpu_custom_call.1} parent=39 // pred_fallthru
          _
        // Predicated region
        $region45: #{tpu_custom_call.1} parent=39 // pred_check
          %p320 = pneg %p84
        $region46: #{tpu_custom_call.1} parent=39 // pred_check_branch
          %322 = sbr.rel (%p320) target = $region48
        $region47: #{tpu_custom_call.1} parent=39 // pred_region
          %s323 = sand.u32 %s24, 1
          %s324 = scalar_lea.sflag [#allocation8], %s323
          %s325 = sand.u32 %s74, 1
          %s326 = smul.addr %s325, 4
          %s327 = scalar_lea.vmem [#allocation7], %s326
          %s329 = ssub.s32 64, 64
          %330 = vsyncadd %s324, %s329
          %s331 = smul.addr %s31, 64
          %s332 = scalar_lea.hbm %s1, %s331
          %s334 = sshll.u32 %s327, 4
          %s335 = int_to_ptr.vmem [resolvable:$true] %s334
          %337 = dma.hbm_to_vmem [thread:$0]  %s332, 64, %s335, %s324
        $region48: #{tpu_custom_call.1} parent=39 // pred_fallthru
          _
      $region40: #{tpu_custom_call.1} parent=5 // pred_fallthru
        _
      %p338 = scmp.le.s32.totalorder 1, %s24
      %p339 = scmp.lt.s32.totalorder %s24, 3
      %p340 = pnand %p338, %p339
      %p341 = pneg %p340
      // Predicated region
      $region49: #{tpu_custom_call.1} parent=5 // pred_check
        _
      $region50: #{tpu_custom_call.1} parent=5 // pred_check_branch
        %343 = sbr.rel (%p340) target = $region52
      $region51: #{tpu_custom_call.1} parent=5 // pred_region
        %s344 = ssub.s32 %s24, 1
        %s345 = sand.u32 %s51, 1
        %s346 = scalar_lea.sflag [#allocation5], %s345
        %s347 = sand.u32 %s51, 1
        %s348 = smul.addr %s347, 4
        %s349 = scalar_lea.vmem [#allocation4], %s348
        // Predicated region
        $region53: #{tpu_custom_call.1} parent=51 // pred_check
          %p350 = pneg %p64
        $region54: #{tpu_custom_call.1} parent=51 // pred_check_branch
          %352 = sbr.rel (%p350) target = $region56
        $region55: #{tpu_custom_call.1} parent=51 // pred_region
          %353 = dma.done %s346, 64
        $region56: #{tpu_custom_call.1} parent=51 // pred_fallthru
          _
        %s354 = sand.u32 %s29, 1
        %s355 = scalar_lea.sflag [#allocation8], %s354
        %s356 = sand.u32 %s77, 1
        %s357 = smul.addr %s356, 4
        %s358 = scalar_lea.vmem [#allocation7], %s357
        // Predicated region
        $region57: #{tpu_custom_call.1} parent=51 // pred_check
          %p359 = pneg %p90
        $region58: #{tpu_custom_call.1} parent=51 // pred_check_branch
          %361 = sbr.rel (%p359) target = $region60
        $region59: #{tpu_custom_call.1} parent=51 // pred_region
          %362 = dma.done %s355, 64
        $region60: #{tpu_custom_call.1} parent=51 // pred_fallthru
          _
        // Predicated region
        $region61: #{tpu_custom_call.1} parent=51 // pred_check
          %p363 = pneg %p111
        $region62: #{tpu_custom_call.1} parent=51 // pred_check_branch
          %365 = sbr.rel (%p363) target = $region64
        $region63: #{tpu_custom_call.1} parent=51 // pred_region
          %366 = dma.done [#allocation8], 256
        $region64: #{tpu_custom_call.1} parent=51 // pred_fallthru
          _
        // Predicated region
        $region65: #{tpu_custom_call.1} parent=51 // pred_check
          %p367 = pneg %p153
        $region66: #{tpu_custom_call.1} parent=51 // pred_check_branch
          %369 = sbr.rel (%p367) target = $region68
        $region67: #{tpu_custom_call.1} parent=51 // pred_region
          %370 = dma.done [#allocation11], 256
        $region68: #{tpu_custom_call.1} parent=51 // pred_fallthru
          _
        %s371 = sand.u32 %s51, 1
        %s372 = scalar_lea.sflag [#allocation5], %s371
        %s373 = sand.u32 %s51, 1
        %s374 = smul.addr %s373, 4
        %s375 = scalar_lea.vmem [#allocation4], %s374
        %p376 = pneg %p64
        %p377 = pneg %p61
        %s378 = sand.u32 %s29, 1
        %s379 = scalar_lea.sflag [#allocation8], %s378
        %s380 = sand.u32 %s77, 1
        %s381 = smul.addr %s380, 4
        %s382 = scalar_lea.vmem [#allocation7], %s381
        %p383 = pneg %p90
        %p384 = pneg %p87
        %p385 = pneg %p111
        %p386 = pneg %p108
        %p387 = pneg %p132
        %p388 = pneg %p129
        %p389 = pneg %p153
        %p390 = pneg %p150
        %p391 = pneg %p174
        %p392 = pneg %p171
        %p393 = pneg %p195
        %p394 = pneg %p192
        %p395 = pneg %p216
        %p396 = pneg %p213
        %p397 = pneg %p244
        %p398 = pneg %p241
        %s399 = sand.u32 %s231, 1
        %s400 = scalar_lea.sflag [#allocation6], %s399
        %s401 = sand.u32 %s231, 1
        %s402 = smul.addr %s401, 8
        %s403 = scalar_lea.vmem [#allocation12], %s402
        %p405 = scmp.eq.s32.totalorder %s34, 0
        // Predicated region
        $region69: #{tpu_custom_call.1} parent=51 // pred_check
          %p406 = pneg %p405
        $region70: #{tpu_custom_call.1} parent=51 // pred_check_branch
          %408 = sbr.rel (%p406) target = $region72
        $region71: #{tpu_custom_call.1} parent=51 // pred_region
          %v409 = vld [vmem:[%s358] sm:$0xf]
          %v410 = vld [vmem:[#allocation10] sm:$0xf]
          %v411 = vld [vmem:[#allocation10 + $0x4] sm:$0xf]
          %v412 = vld [vmem:[#allocation10 + $0x8] sm:$0xf]
          %v413 = vld [vmem:[#allocation10 + $0xc] sm:$0xf]
          %v414 = vld [vmem:[%s5] sm:$0x1]
          %v416 = vlaneseq
          %v417 = vshrl.u32 %v416, 7
          %v418 = vsub.s32 0, %v417
          %v419 = vrot.slane %v414, %v418
          %v425 = vunpack.c.l.b16 %v410
          %v426 = vunpack.c.l.b16 %v411
          %v427 = vunpack.c.l.b16 %v412
          %v428 = vunpack.c.l.b16 %v413
          %v429 = vpack.c.b16 %v426, %v425
          %v430 = vpack.c.b16 %v428, %v427
          %vm433 = vcmask 261120
          %v435 = vsel %vm433, %v409, 0
          %437 = vmatprep.subr.bf16.mxu0 0
          %438 = vmatpush1.bf16.msra.mxu0 %v429
          %439 = vmatprep.subr.bf16.mxu0 0
          %440 = vmatpush1.bf16.msra.mxu0 %v430
          %441 = vmatprep.subr.bf16.mxu0 0
          %442 = vmatpush1.bf16.msra.mxu0 0
          %443 = vmatprep.subr.bf16.mxu0 0
          %444 = vmatpush1.bf16.msra.mxu0 0
          %445 = vmatprep.subr.bf16.mxu0 0
          %446 = vmatpush1.bf16.msra.mxu0 0
          %447 = vmatprep.subr.bf16.mxu0 0
          %448 = vmatpush1.bf16.msra.mxu0 0
          %449 = vmatprep.subr.bf16.mxu0 0
          %450 = vmatpush1.bf16.msra.mxu0 0
          %451 = vmatprep.subr.bf16.mxu0 0
          %452 = vmatpush1.bf16.msra.mxu0 0
          %453 = vmatprep.subr.bf16.mxu0 0
          %454 = vmatpush1.bf16.msra.mxu0 0
          %455 = vmatprep.subr.bf16.mxu0 0
          %456 = vmatpush1.bf16.msra.mxu0 0
          %457 = vmatprep.subr.bf16.mxu0 0
          %458 = vmatpush1.bf16.msra.mxu0 0
          %459 = vmatprep.subr.bf16.mxu0 0
          %460 = vmatpush1.bf16.msra.mxu0 0
          %461 = vmatprep.subr.bf16.mxu0 0
          %462 = vmatpush1.bf16.msra.mxu0 0
          %463 = vmatprep.subr.bf16.mxu0 0
          %464 = vmatpush1.bf16.msra.mxu0 0
          %465 = vmatprep.subr.bf16.mxu0 0
          %466 = vmatpush1.bf16.msra.mxu0 0
          %467 = vmatprep.subr.bf16.mxu0 0
          %468 = vmatpush1.bf16.msra.mxu0 0
          %469 = vmatprep.mubr.bf16.mxu0 0
          %470 = vmatmul.mubr.bf16.gmra.mrb[0].mxu0 %v435
          %v471 = vpop.f32.mrb[0].mxu0
          %v472 = vadd.f32 %v419, %v471
          %v473 = vpop.f32.mrb[0].mxu0
          %v474 = vpop.f32.mrb[0].mxu0
          %v475 = vpop.f32.mrb[0].mxu0
          %476 = vdwg.mxu0
          %v477 = vpack.c.bf16 %v472, %v472
          %vm478 = vcmask 519168
          %479 = vst.msk [vmem:[#allocation2] sm:$0xf] %vm478, %v477
        $region72: #{tpu_custom_call.1} parent=51 // pred_fallthru
          _
        %v480 = vld [vmem:[%s349] sm:$0xf]
        %v481 = vld [vmem:[#allocation9] sm:$0xf]
        %v482 = vld [vmem:[#allocation9 + $0x4] sm:$0xf]
        %v483 = vld [vmem:[#allocation9 + $0x8] sm:$0xf]
        %v484 = vld [vmem:[#allocation9 + $0xc] sm:$0xf]
        %v485 = vld [vmem:[%s3] sm:$0x1]
        %v487 = vlaneseq
        %v488 = vshrl.u32 %v487, 7
        %v489 = vsub.s32 0, %v488
        %v490 = vrot.slane %v485, %v489
        %v496 = vunpack.c.l.b16 %v481
        %v497 = vunpack.c.l.b16 %v482
        %v498 = vunpack.c.l.b16 %v483
        %v499 = vunpack.c.l.b16 %v484
        %v500 = vpack.c.b16 %v497, %v496
        %v501 = vpack.c.b16 %v499, %v498
        %vm504 = vcmask 261120
        %v506 = vsel %vm504, %v480, 0
        %508 = vmatprep.subr.bf16.mxu0 0
        %509 = vmatpush1.bf16.msra.mxu0 %v500
        %510 = vmatprep.subr.bf16.mxu0 0
        %511 = vmatpush1.bf16.msra.mxu0 %v501
        %512 = vmatprep.subr.bf16.mxu0 0
        %513 = vmatpush1.bf16.msra.mxu0 0
        %514 = vmatprep.subr.bf16.mxu0 0
        %515 = vmatpush1.bf16.msra.mxu0 0
        %516 = vmatprep.subr.bf16.mxu0 0
        %517 = vmatpush1.bf16.msra.mxu0 0
        %518 = vmatprep.subr.bf16.mxu0 0
        %519 = vmatpush1.bf16.msra.mxu0 0
        %520 = vmatprep.subr.bf16.mxu0 0
        %521 = vmatpush1.bf16.msra.mxu0 0
        %522 = vmatprep.subr.bf16.mxu0 0
        %523 = vmatpush1.bf16.msra.mxu0 0
        %524 = vmatprep.subr.bf16.mxu0 0
        %525 = vmatpush1.bf16.msra.mxu0 0
        %526 = vmatprep.subr.bf16.mxu0 0
        %527 = vmatpush1.bf16.msra.mxu0 0
        %528 = vmatprep.subr.bf16.mxu0 0
        %529 = vmatpush1.bf16.msra.mxu0 0
        %530 = vmatprep.subr.bf16.mxu0 0
        %531 = vmatpush1.bf16.msra.mxu0 0
        %532 = vmatprep.subr.bf16.mxu0 0
        %533 = vmatpush1.bf16.msra.mxu0 0
        %534 = vmatprep.subr.bf16.mxu0 0
        %535 = vmatpush1.bf16.msra.mxu0 0
        %536 = vmatprep.subr.bf16.mxu0 0
        %537 = vmatpush1.bf16.msra.mxu0 0
        %538 = vmatprep.subr.bf16.mxu0 0
        %539 = vmatpush1.bf16.msra.mxu0 0
        %540 = vmatprep.mubr.bf16.mxu0 0
        %541 = vmatmul.mubr.bf16.gmra.mrb[0].mxu0 %v506
        %v542 = vpop.f32.mrb[0].mxu0
        %v543 = vadd.f32 %v490, %v542
        %v544 = vpop.f32.mrb[0].mxu0
        %v545 = vpop.f32.mrb[0].mxu0
        %v546 = vpop.f32.mrb[0].mxu0
        %547 = vdwg.mxu0
        %v548 = vpack.c.bf16 %v543, %v543
        %v549 = vld [vmem:[#allocation2] sm:$0xf]
        %vm550 = vcmask 64512
        %v552 = vsel %vm550, %v548, 0
        %v555 = vsel %vm550, %v549, 0
        %557 = vmatprep.subr.bf16.mxu0 0
        %558 = vmatpush1.bf16.xpose.msra.mxu0 %v555
        %559 = vmatprep.subr.bf16.mxu0 0
        %560 = vmatpush1.bf16.xpose.msra.mxu0 0
        %561 = vmatprep.subr.bf16.mxu0 0
        %562 = vmatpush1.bf16.xpose.msra.mxu0 0
        %563 = vmatprep.subr.bf16.mxu0 0
        %564 = vmatpush1.bf16.xpose.msra.mxu0 0
        %565 = vmatprep.subr.bf16.mxu0 0
        %566 = vmatpush1.bf16.xpose.msra.mxu0 0
        %567 = vmatprep.subr.bf16.mxu0 0
        %568 = vmatpush1.bf16.xpose.msra.mxu0 0
        %569 = vmatprep.subr.bf16.mxu0 0
        %570 = vmatpush1.bf16.xpose.msra.mxu0 0
        %571 = vmatprep.subr.bf16.mxu0 0
        %572 = vmatpush1.bf16.xpose.msra.mxu0 0
        %573 = vmatprep.subr.bf16.mxu0 0
        %574 = vmatpush1.bf16.xpose.msra.mxu0 0
        %575 = vmatprep.subr.bf16.mxu0 0
        %576 = vmatpush1.bf16.xpose.msra.mxu0 0
        %577 = vmatprep.subr.bf16.mxu0 0
        %578 = vmatpush1.bf16.xpose.msra.mxu0 0
        %579 = vmatprep.subr.bf16.mxu0 0
        %580 = vmatpush1.bf16.xpose.msra.mxu0 0
        %581 = vmatprep.subr.bf16.mxu0 0
        %582 = vmatpush1.bf16.xpose.msra.mxu0 0
        %583 = vmatprep.subr.bf16.mxu0 0
        %584 = vmatpush1.bf16.xpose.msra.mxu0 0
        %585 = vmatprep.subr.bf16.mxu0 0
        %586 = vmatpush1.bf16.xpose.msra.mxu0 0
        %587 = vmatprep.subr.bf16.mxu0 0
        %588 = vmatpush1.bf16.xpose.msra.mxu0 0
        %589 = vmatprep.mubr.bf16.mxu0 0
        %590 = vmatmul.mubr.bf16.gmra.mrb[0].mxu0 %v552
        %v591 = vpop.f32.mrb[0].mxu0
        %v592 = vadd.f32 0.0, %v591
        %v593 = vpop.f32.mrb[0].mxu0
        %v594 = vpop.f32.mrb[0].mxu0
        %v595 = vpop.f32.mrb[0].mxu0
        %596 = vdwg.mxu0
        %v597 = vmul.f32 %v592, 0.35355338
        %v598 = vsel %vm550, %v597, -inf
        %599 = vmax.xlane.f32.xlu0 %v598
        %v600 = vpop.xlane.xlu0 %599
        %v601 = vsub.f32 %v597, %v600
        %v602 = vmul.f32 %v601, 1.442695
        %v603 = vpow.pop %v602
        %v604 = vsel %vm550, %v603, 0.0
        %605 = vadd.xlane.f32.xlu0 %v604
        %v606 = vpop.xlane.xlu0 %605
        %v607 = vrcp.pop %v606
        %v608 = vmul.f32 %v603, %v607
        %v609 = vpack.c.bf16 %v608, %v608
        %v611 = vunpack.c.l.b16 %v549
        %v612 = vpack.c.b16 %v611, %v611
        %613 = vrot.lane.b32.xlu0 %v612, 96
        %v614 = vpop.permute.xlu0 %613
        %v616 = vsel %vm550, %v609, 0
        %vm618 = vcmask 1043456
        %v620 = vsel %vm618, %v614, 0
        %622 = vmatprep.subr.bf16.mxu0 0
        %623 = vmatpush1.bf16.msra.mxu0 %v620
        %624 = vmatprep.subr.bf16.mxu0 0
        %625 = vmatpush1.bf16.msra.mxu0 0
        %626 = vmatprep.subr.bf16.mxu0 0
        %627 = vmatpush1.bf16.msra.mxu0 0
        %628 = vmatprep.subr.bf16.mxu0 0
        %629 = vmatpush1.bf16.msra.mxu0 0
        %630 = vmatprep.subr.bf16.mxu0 0
        %631 = vmatpush1.bf16.msra.mxu0 0
        %632 = vmatprep.subr.bf16.mxu0 0
        %633 = vmatpush1.bf16.msra.mxu0 0
        %634 = vmatprep.subr.bf16.mxu0 0
        %635 = vmatpush1.bf16.msra.mxu0 0
        %636 = vmatprep.subr.bf16.mxu0 0
        %637 = vmatpush1.bf16.msra.mxu0 0
        %638 = vmatprep.subr.bf16.mxu0 0
        %639 = vmatpush1.bf16.msra.mxu0 0
        %640 = vmatprep.subr.bf16.mxu0 0
        %641 = vmatpush1.bf16.msra.mxu0 0
        %642 = vmatprep.subr.bf16.mxu0 0
        %643 = vmatpush1.bf16.msra.mxu0 0
        %644 = vmatprep.subr.bf16.mxu0 0
        %645 = vmatpush1.bf16.msra.mxu0 0
        %646 = vmatprep.subr.bf16.mxu0 0
        %647 = vmatpush1.bf16.msra.mxu0 0
        %648 = vmatprep.subr.bf16.mxu0 0
        %649 = vmatpush1.bf16.msra.mxu0 0
        %650 = vmatprep.subr.bf16.mxu0 0
        %651 = vmatpush1.bf16.msra.mxu0 0
        %652 = vmatprep.subr.bf16.mxu0 0
        %653 = vmatpush1.bf16.msra.mxu0 0
        %654 = vmatprep.mubr.bf16.mxu0 0
        %655 = vmatmul.mubr.bf16.gmra.mrb[0].mxu0 %v616
        %v656 = vpop.f32.mrb[0].mxu0
        %v657 = vadd.f32 0.0, %v656
        %v658 = vpop.f32.mrb[0].mxu0
        %v659 = vpop.f32.mrb[0].mxu0
        %v660 = vpop.f32.mrb[0].mxu0
        %661 = vdwg.mxu0
        %v662 = vpack.c.bf16 %v657, %v657
        %vm663 = vcmask 60416
        %664 = vst.msk [vmem:[#allocation3] sm:$0xf] %vm663, %v662
        %v665 = vld [vmem:[#allocation2] sm:$0xf]
        %667 = vrot.lane.b32.xlu0 %v548, 120
        %v668 = vpop.permute.xlu0 %667
        %v670 = vunpack.c.l.b16 %v665
        %v671 = vpack.c.b16 %v670, %v670
        %672 = vrot.lane.b32.xlu0 %v671, 120
        %v673 = vpop.permute.xlu0 %672
        %v675 = vsel %vm550, %v668, 0
        %v678 = vsel %vm550, %v673, 0
        %680 = vmatprep.subr.bf16.mxu0 0
        %681 = vmatpush1.bf16.xpose.msra.mxu0 %v678
        %682 = vmatprep.subr.bf16.mxu0 0
        %683 = vmatpush1.bf16.xpose.msra.mxu0 0
        %684 = vmatprep.subr.bf16.mxu0 0
        %685 = vmatpush1.bf16.xpose.msra.mxu0 0
        %686 = vmatprep.subr.bf16.mxu0 0
        %687 = vmatpush1.bf16.xpose.msra.mxu0 0
        %688 = vmatprep.subr.bf16.mxu0 0
        %689 = vmatpush1.bf16.xpose.msra.mxu0 0
        %690 = vmatprep.subr.bf16.mxu0 0
        %691 = vmatpush1.bf16.xpose.msra.mxu0 0
        %692 = vmatprep.subr.bf16.mxu0 0
        %693 = vmatpush1.bf16.xpose.msra.mxu0 0
        %694 = vmatprep.subr.bf16.mxu0 0
        %695 = vmatpush1.bf16.xpose.msra.mxu0 0
        %696 = vmatprep.subr.bf16.mxu0 0
        %697 = vmatpush1.bf16.xpose.msra.mxu0 0
        %698 = vmatprep.subr.bf16.mxu0 0
        %699 = vmatpush1.bf16.xpose.msra.mxu0 0
        %700 = vmatprep.subr.bf16.mxu0 0
        %701 = vmatpush1.bf16.xpose.msra.mxu0 0
        %702 = vmatprep.subr.bf16.mxu0 0
        %703 = vmatpush1.bf16.xpose.msra.mxu0 0
        %704 = vmatprep.subr.bf16.mxu0 0
        %705 = vmatpush1.bf16.xpose.msra.mxu0 0
        %706 = vmatprep.subr.bf16.mxu0 0
        %707 = vmatpush1.bf16.xpose.msra.mxu0 0
        %708 = vmatprep.subr.bf16.mxu0 0
        %709 = vmatpush1.bf16.xpose.msra.mxu0 0
        %710 = vmatprep.subr.bf16.mxu0 0
        %711 = vmatpush1.bf16.xpose.msra.mxu0 0
        %712 = vmatprep.mubr.bf16.mxu0 0
        %713 = vmatmul.mubr.bf16.gmra.mrb[0].mxu0 %v675
        %v714 = vpop.f32.mrb[0].mxu0
        %v715 = vadd.f32 0.0, %v714
        %v716 = vpop.f32.mrb[0].mxu0
        %v717 = vpop.f32.mrb[0].mxu0
        %v718 = vpop.f32.mrb[0].mxu0
        %719 = vdwg.mxu0
        %v720 = vmul.f32 %v715, 0.35355338
        %v721 = vsel %vm550, %v720, -inf
        %722 = vmax.xlane.f32.xlu0 %v721
        %v723 = vpop.xlane.xlu0 %722
        %v724 = vsub.f32 %v720, %v723
        %v725 = vmul.f32 %v724, 1.442695
        %v726 = vpow.pop %v725
        %v727 = vsel %vm550, %v726, 0.0
        %728 = vadd.xlane.f32.xlu0 %v727
        %v729 = vpop.xlane.xlu0 %728
        %v730 = vrcp.pop %v729
        %v731 = vmul.f32 %v726, %v730
        %v732 = vpack.c.bf16 %v731, %v731
        %733 = vrot.lane.b32.xlu0 %v671, 88
        %v734 = vpop.permute.xlu0 %733
        %v736 = vsel %vm550, %v732, 0
        %v739 = vsel %vm618, %v734, 0
        %741 = vmatprep.subr.bf16.mxu0 0
        %742 = vmatpush1.bf16.msra.mxu0 %v739
        %743 = vmatprep.subr.bf16.mxu0 0
        %744 = vmatpush1.bf16.msra.mxu0 0
        %745 = vmatprep.subr.bf16.mxu0 0
        %746 = vmatpush1.bf16.msra.mxu0 0
        %747 = vmatprep.subr.bf16.mxu0 0
        %748 = vmatpush1.bf16.msra.mxu0 0
        %749 = vmatprep.subr.bf16.mxu0 0
        %750 = vmatpush1.bf16.msra.mxu0 0
        %751 = vmatprep.subr.bf16.mxu0 0
        %752 = vmatpush1.bf16.msra.mxu0 0
        %753 = vmatprep.subr.bf16.mxu0 0
        %754 = vmatpush1.bf16.msra.mxu0 0
        %755 = vmatprep.subr.bf16.mxu0 0
        %756 = vmatpush1.bf16.msra.mxu0 0
        %757 = vmatprep.subr.bf16.mxu0 0
        %758 = vmatpush1.bf16.msra.mxu0 0
        %759 = vmatprep.subr.bf16.mxu0 0
        %760 = vmatpush1.bf16.msra.mxu0 0
        %761 = vmatprep.subr.bf16.mxu0 0
        %762 = vmatpush1.bf16.msra.mxu0 0
        %763 = vmatprep.subr.bf16.mxu0 0
        %764 = vmatpush1.bf16.msra.mxu0 0
        %765 = vmatprep.subr.bf16.mxu0 0
        %766 = vmatpush1.bf16.msra.mxu0 0
        %767 = vmatprep.subr.bf16.mxu0 0
        %768 = vmatpush1.bf16.msra.mxu0 0
        %769 = vmatprep.subr.bf16.mxu0 0
        %770 = vmatpush1.bf16.msra.mxu0 0
        %771 = vmatprep.subr.bf16.mxu0 0
        %772 = vmatpush1.bf16.msra.mxu0 0
        %773 = vmatprep.mubr.bf16.mxu0 0
        %774 = vmatmul.mubr.bf16.gmra.mrb[0].mxu0 %v736
        %v775 = vpop.f32.mrb[0].mxu0
        %v776 = vadd.f32 0.0, %v775
        %v777 = vpop.f32.mrb[0].mxu0
        %v778 = vpop.f32.mrb[0].mxu0
        %v779 = vpop.f32.mrb[0].mxu0
        %780 = vdwg.mxu0
        %v781 = vpack.c.bf16 %v776, %v776
        %v783 = vunpack.c.l.b16 %v781
        %v784 = vpack.c.b16 %v783, %v783
        %785 = vrot.lane.b32.xlu0 %v784, 8
        %v786 = vpop.permute.xlu0 %785
        %vm788 = vcmask 126016
        %789 = vst.msk [vmem:[#allocation3] sm:$0xf] %vm788, %v786
        %v790 = vld [vmem:[#allocation2] sm:$0xf]
        %791 = vrot.lane.b32.xlu0 %v548, 112
        %v792 = vpop.permute.xlu0 %791
        %v794 = vunpack.c.l.b16 %v790
        %v795 = vpack.c.b16 %v794, %v794
        %796 = vrot.lane.b32.xlu0 %v795, 112
        %v797 = vpop.permute.xlu0 %796
        %v799 = vsel %vm550, %v792, 0
        %v802 = vsel %vm550, %v797, 0
        %804 = vmatprep.subr.bf16.mxu0 0
        %805 = vmatpush1.bf16.xpose.msra.mxu0 %v802
        %806 = vmatprep.subr.bf16.mxu0 0
        %807 = vmatpush1.bf16.xpose.msra.mxu0 0
        %808 = vmatprep.subr.bf16.mxu0 0
        %809 = vmatpush1.bf16.xpose.msra.mxu0 0
        %810 = vmatprep.subr.bf16.mxu0 0
        %811 = vmatpush1.bf16.xpose.msra.mxu0 0
        %812 = vmatprep.subr.bf16.mxu0 0
        %813 = vmatpush1.bf16.xpose.msra.mxu0 0
        %814 = vmatprep.subr.bf16.mxu0 0
        %815 = vmatpush1.bf16.xpose.msra.mxu0 0
        %816 = vmatprep.subr.bf16.mxu0 0
        %817 = vmatpush1.bf16.xpose.msra.mxu0 0
        %818 = vmatprep.subr.bf16.mxu0 0
        %819 = vmatpush1.bf16.xpose.msra.mxu0 0
        %820 = vmatprep.subr.bf16.mxu0 0
        %821 = vmatpush1.bf16.xpose.msra.mxu0 0
        %822 = vmatprep.subr.bf16.mxu0 0
        %823 = vmatpush1.bf16.xpose.msra.mxu0 0
        %824 = vmatprep.subr.bf16.mxu0 0
        %825 = vmatpush1.bf16.xpose.msra.mxu0 0
        %826 = vmatprep.subr.bf16.mxu0 0
        %827 = vmatpush1.bf16.xpose.msra.mxu0 0
        %828 = vmatprep.subr.bf16.mxu0 0
        %829 = vmatpush1.bf16.xpose.msra.mxu0 0
        %830 = vmatprep.subr.bf16.mxu0 0
        %831 = vmatpush1.bf16.xpose.msra.mxu0 0
        %832 = vmatprep.subr.bf16.mxu0 0
        %833 = vmatpush1.bf16.xpose.msra.mxu0 0
        %834 = vmatprep.subr.bf16.mxu0 0
        %835 = vmatpush1.bf16.xpose.msra.mxu0 0
        %836 = vmatprep.mubr.bf16.mxu0 0
        %837 = vmatmul.mubr.bf16.gmra.mrb[0].mxu0 %v799
        %v838 = vpop.f32.mrb[0].mxu0
        %v839 = vadd.f32 0.0, %v838
        %v840 = vpop.f32.mrb[0].mxu0
        %v841 = vpop.f32.mrb[0].mxu0
        %v842 = vpop.f32.mrb[0].mxu0
        %843 = vdwg.mxu0
        %v844 = vmul.f32 %v839, 0.35355338
        %v845 = vsel %vm550, %v844, -inf
        %846 = vmax.xlane.f32.xlu0 %v845
        %v847 = vpop.xlane.xlu0 %846
        %v848 = vsub.f32 %v844, %v847
        %v849 = vmul.f32 %v848, 1.442695
        %v850 = vpow.pop %v849
        %v851 = vsel %vm550, %v850, 0.0
        %852 = vadd.xlane.f32.xlu0 %v851
        %v853 = vpop.xlane.xlu0 %852
        %v854 = vrcp.pop %v853
        %v855 = vmul.f32 %v850, %v854
        %v856 = vpack.c.bf16 %v855, %v855
        %857 = vrot.lane.b32.xlu0 %v795, 80
        %v858 = vpop.permute.xlu0 %857
        %v860 = vsel %vm550, %v856, 0
        %v863 = vsel %vm618, %v858, 0
        %865 = vmatprep.subr.bf16.mxu0 0
        %866 = vmatpush1.bf16.msra.mxu0 %v863
        %867 = vmatprep.subr.bf16.mxu0 0
        %868 = vmatpush1.bf16.msra.mxu0 0
        %869 = vmatprep.subr.bf16.mxu0 0
        %870 = vmatpush1.bf16.msra.mxu0 0
        %871 = vmatprep.subr.bf16.mxu0 0
        %872 = vmatpush1.bf16.msra.mxu0 0
        %873 = vmatprep.subr.bf16.mxu0 0
        %874 = vmatpush1.bf16.msra.mxu0 0
        %875 = vmatprep.subr.bf16.mxu0 0
        %876 = vmatpush1.bf16.msra.mxu0 0
        %877 = vmatprep.subr.bf16.mxu0 0
        %878 = vmatpush1.bf16.msra.mxu0 0
        %879 = vmatprep.subr.bf16.mxu0 0
        %880 = vmatpush1.bf16.msra.mxu0 0
        %881 = vmatprep.subr.bf16.mxu0 0
        %882 = vmatpush1.bf16.msra.mxu0 0
        %883 = vmatprep.subr.bf16.mxu0 0
        %884 = vmatpush1.bf16.msra.mxu0 0
        %885 = vmatprep.subr.bf16.mxu0 0
        %886 = vmatpush1.bf16.msra.mxu0 0
        %887 = vmatprep.subr.bf16.mxu0 0
        %888 = vmatpush1.bf16.msra.mxu0 0
        %889 = vmatprep.subr.bf16.mxu0 0
        %890 = vmatpush1.bf16.msra.mxu0 0
        %891 = vmatprep.subr.bf16.mxu0 0
        %892 = vmatpush1.bf16.msra.mxu0 0
        %893 = vmatprep.subr.bf16.mxu0 0
        %894 = vmatpush1.bf16.msra.mxu0 0
        %895 = vmatprep.subr.bf16.mxu0 0
        %896 = vmatpush1.bf16.msra.mxu0 0
        %897 = vmatprep.mubr.bf16.mxu0 0
        %898 = vmatmul.mubr.bf16.gmra.mrb[0].mxu0 %v860
        %v899 = vpop.f32.mrb[0].mxu0
        %v900 = vadd.f32 0.0, %v899
        %v901 = vpop.f32.mrb[0].mxu0
        %v902 = vpop.f32.mrb[0].mxu0
        %v903 = vpop.f32.mrb[0].mxu0
        %904 = vdwg.mxu0
        %v905 = vpack.c.bf16 %v900, %v900
        %v907 = vunpack.c.l.b16 %v905
        %v908 = vpack.c.b16 %v907, %v907
        %909 = vrot.lane.b32.xlu0 %v908, 16
        %v910 = vpop.permute.xlu0 %909
        %vm912 = vcmask 191616
        %913 = vst.msk [vmem:[#allocation3] sm:$0xf] %vm912, %v910
        %v914 = vld [vmem:[#allocation2] sm:$0xf]
        %915 = vrot.lane.b32.xlu0 %v548, 104
        %v916 = vpop.permute.xlu0 %915
        %v918 = vunpack.c.l.b16 %v914
        %v919 = vpack.c.b16 %v918, %v918
        %920 = vrot.lane.b32.xlu0 %v919, 104
        %v921 = vpop.permute.xlu0 %920
        %v923 = vsel %vm550, %v916, 0
        %v926 = vsel %vm550, %v921, 0
        %928 = vmatprep.subr.bf16.mxu0 0
        %929 = vmatpush1.bf16.xpose.msra.mxu0 %v926
        %930 = vmatprep.subr.bf16.mxu0 0
        %931 = vmatpush1.bf16.xpose.msra.mxu0 0
        %932 = vmatprep.subr.bf16.mxu0 0
        %933 = vmatpush1.bf16.xpose.msra.mxu0 0
        %934 = vmatprep.subr.bf16.mxu0 0
        %935 = vmatpush1.bf16.xpose.msra.mxu0 0
        %936 = vmatprep.subr.bf16.mxu0 0
        %937 = vmatpush1.bf16.xpose.msra.mxu0 0
        %938 = vmatprep.subr.bf16.mxu0 0
        %939 = vmatpush1.bf16.xpose.msra.mxu0 0
        %940 = vmatprep.subr.bf16.mxu0 0
        %941 = vmatpush1.bf16.xpose.msra.mxu0 0
        %942 = vmatprep.subr.bf16.mxu0 0
        %943 = vmatpush1.bf16.xpose.msra.mxu0 0
        %944 = vmatprep.subr.bf16.mxu0 0
        %945 = vmatpush1.bf16.xpose.msra.mxu0 0
        %946 = vmatprep.subr.bf16.mxu0 0
        %947 = vmatpush1.bf16.xpose.msra.mxu0 0
        %948 = vmatprep.subr.bf16.mxu0 0
        %949 = vmatpush1.bf16.xpose.msra.mxu0 0
        %950 = vmatprep.subr.bf16.mxu0 0
        %951 = vmatpush1.bf16.xpose.msra.mxu0 0
        %952 = vmatprep.subr.bf16.mxu0 0
        %953 = vmatpush1.bf16.xpose.msra.mxu0 0
        %954 = vmatprep.subr.bf16.mxu0 0
        %955 = vmatpush1.bf16.xpose.msra.mxu0 0
        %956 = vmatprep.subr.bf16.mxu0 0
        %957 = vmatpush1.bf16.xpose.msra.mxu0 0
        %958 = vmatprep.subr.bf16.mxu0 0
        %959 = vmatpush1.bf16.xpose.msra.mxu0 0
        %960 = vmatprep.mubr.bf16.mxu0 0
        %961 = vmatmul.mubr.bf16.gmra.mrb[0].mxu0 %v923
        %v962 = vpop.f32.mrb[0].mxu0
        %v963 = vadd.f32 0.0, %v962
        %v964 = vpop.f32.mrb[0].mxu0
        %v965 = vpop.f32.mrb[0].mxu0
        %v966 = vpop.f32.mrb[0].mxu0
        %967 = vdwg.mxu0
        %v968 = vmul.f32 %v963, 0.35355338
        %v969 = vsel %vm550, %v968, -inf
        %970 = vmax.xlane.f32.xlu0 %v969
        %v971 = vpop.xlane.xlu0 %970
        %v972 = vsub.f32 %v968, %v971
        %v973 = vmul.f32 %v972, 1.442695
        %v974 = vpow.pop %v973
        %v975 = vsel %vm550, %v974, 0.0
        %976 = vadd.xlane.f32.xlu0 %v975
        %v977 = vpop.xlane.xlu0 %976
        %v978 = vrcp.pop %v977
        %v979 = vmul.f32 %v974, %v978
        %v980 = vpack.c.bf16 %v979, %v979
        %981 = vrot.lane.b32.xlu0 %v919, 72
        %v982 = vpop.permute.xlu0 %981
        %v984 = vsel %vm550, %v980, 0
        %v987 = vsel %vm618, %v982, 0
        %989 = vmatprep.subr.bf16.mxu0 0
        %990 = vmatpush1.bf16.msra.mxu0 %v987
        %991 = vmatprep.subr.bf16.mxu0 0
        %992 = vmatpush1.bf16.msra.mxu0 0
        %993 = vmatprep.subr.bf16.mxu0 0
        %994 = vmatpush1.bf16.msra.mxu0 0
        %995 = vmatprep.subr.bf16.mxu0 0
        %996 = vmatpush1.bf16.msra.mxu0 0
        %997 = vmatprep.subr.bf16.mxu0 0
        %998 = vmatpush1.bf16.msra.mxu0 0
        %999 = vmatprep.subr.bf16.mxu0 0
        %1000 = vmatpush1.bf16.msra.mxu0 0
        %1001 = vmatprep.subr.bf16.mxu0 0
        %1002 = vmatpush1.bf16.msra.mxu0 0
        %1003 = vmatprep.subr.bf16.mxu0 0
        %1004 = vmatpush1.bf16.msra.mxu0 0
        %1005 = vmatprep.subr.bf16.mxu0 0
        %1006 = vmatpush1.bf16.msra.mxu0 0
        %1007 = vmatprep.subr.bf16.mxu0 0
        %1008 = vmatpush1.bf16.msra.mxu0 0
        %1009 = vmatprep.subr.bf16.mxu0 0
        %1010 = vmatpush1.bf16.msra.mxu0 0
        %1011 = vmatprep.subr.bf16.mxu0 0
        %1012 = vmatpush1.bf16.msra.mxu0 0
        %1013 = vmatprep.subr.bf16.mxu0 0
        %1014 = vmatpush1.bf16.msra.mxu0 0
        %1015 = vmatprep.subr.bf16.mxu0 0
        %1016 = vmatpush1.bf16.msra.mxu0 0
        %1017 = vmatprep.subr.bf16.mxu0 0
        %1018 = vmatpush1.bf16.msra.mxu0 0
        %1019 = vmatprep.subr.bf16.mxu0 0
        %1020 = vmatpush1.bf16.msra.mxu0 0
        %1021 = vmatprep.mubr.bf16.mxu0 0
        %1022 = vmatmul.mubr.bf16.gmra.mrb[0].mxu0 %v984
        %v1023 = vpop.f32.mrb[0].mxu0
        %v1024 = vadd.f32 0.0, %v1023
        %v1025 = vpop.f32.mrb[0].mxu0
        %v1026 = vpop.f32.mrb[0].mxu0
        %v1027 = vpop.f32.mrb[0].mxu0
        %1028 = vdwg.mxu0
        %v1029 = vpack.c.bf16 %v1024, %v1024
        %v1031 = vunpack.c.l.b16 %v1029
        %v1032 = vpack.c.b16 %v1031, %v1031
        %1033 = vrot.lane.b32.xlu0 %v1032, 24
        %v1034 = vpop.permute.xlu0 %1033
        %vm1036 = vcmask 257216
        %1037 = vst.msk [vmem:[#allocation3] sm:$0xf] %vm1036, %v1034
        %v1038 = vld [vmem:[#allocation3] sm:$0xf]
        %v1039 = vld [vmem:[%s6] sm:$0xf]
        %v1040 = vld [vmem:[%s6 + $0x4] sm:$0xf]
        %v1041 = vld [vmem:[%s6 + $0x8] sm:$0xf]
        %v1042 = vld [vmem:[%s6 + $0xc] sm:$0xf]
        %v1043 = vld [vmem:[%s7] sm:$0x1]
        %v1045 = vlaneseq
        %v1046 = vshrl.u32 %v1045, 7
        %v1047 = vsub.s32 0, %v1046
        %v1048 = vrot.slane %v1043, %v1047
        %v1054 = vunpack.c.l.b16 %v1039
        %v1055 = vunpack.c.l.b16 %v1040
        %v1056 = vunpack.c.l.b16 %v1041
        %v1057 = vunpack.c.l.b16 %v1042
        %v1058 = vpack.c.b16 %v1055, %v1054
        %v1059 = vpack.c.b16 %v1057, %v1056
        %v1063 = vsel %vm504, %v1038, 0
        %1065 = vmatprep.subr.bf16.mxu0 0
        %1066 = vmatpush1.bf16.msra.mxu0 %v1058
        %1067 = vmatprep.subr.bf16.mxu0 0
        %1068 = vmatpush1.bf16.msra.mxu0 %v1059
        %1069 = vmatprep.subr.bf16.mxu0 0
        %1070 = vmatpush1.bf16.msra.mxu0 0
        %1071 = vmatprep.subr.bf16.mxu0 0
        %1072 = vmatpush1.bf16.msra.mxu0 0
        %1073 = vmatprep.subr.bf16.mxu0 0
        %1074 = vmatpush1.bf16.msra.mxu0 0
        %1075 = vmatprep.subr.bf16.mxu0 0
        %1076 = vmatpush1.bf16.msra.mxu0 0
        %1077 = vmatprep.subr.bf16.mxu0 0
        %1078 = vmatpush1.bf16.msra.mxu0 0
        %1079 = vmatprep.subr.bf16.mxu0 0
        %1080 = vmatpush1.bf16.msra.mxu0 0
        %1081 = vmatprep.subr.bf16.mxu0 0
        %1082 = vmatpush1.bf16.msra.mxu0 0
        %1083 = vmatprep.subr.bf16.mxu0 0
        %1084 = vmatpush1.bf16.msra.mxu0 0
        %1085 = vmatprep.subr.bf16.mxu0 0
        %1086 = vmatpush1.bf16.msra.mxu0 0
        %1087 = vmatprep.subr.bf16.mxu0 0
        %1088 = vmatpush1.bf16.msra.mxu0 0
        %1089 = vmatprep.subr.bf16.mxu0 0
        %1090 = vmatpush1.bf16.msra.mxu0 0
        %1091 = vmatprep.subr.bf16.mxu0 0
        %1092 = vmatpush1.bf16.msra.mxu0 0
        %1093 = vmatprep.subr.bf16.mxu0 0
        %1094 = vmatpush1.bf16.msra.mxu0 0
        %1095 = vmatprep.subr.bf16.mxu0 0
        %1096 = vmatpush1.bf16.msra.mxu0 0
        %1097 = vmatprep.mubr.bf16.mxu0 0
        %1098 = vmatmul.mubr.bf16.gmra.mrb[0].mxu0 %v1063
        %v1099 = vpop.f32.mrb[0].mxu0
        %v1100 = vadd.f32 %v1048, %v1099
        %v1101 = vpop.f32.mrb[0].mxu0
        %v1102 = vpop.f32.mrb[0].mxu0
        %v1103 = vpop.f32.mrb[0].mxu0
        %1104 = vdwg.mxu0
        %1105 = vst.msk [vmem:[%s403] sm:$0xff] %vm504, %v1100
        %s1106 = sand.u32 %s231, 1
        %s1107 = scalar_lea.sflag [#allocation6], %s1106
        %s1108 = sand.u32 %s231, 1
        %s1109 = smul.addr %s1108, 8
        %s1110 = scalar_lea.vmem [#allocation12], %s1109
        // Predicated region
        $region73: #{tpu_custom_call.1} parent=51 // pred_check
          %p1111 = pneg %p241
        $region74: #{tpu_custom_call.1} parent=51 // pred_check_branch
          %1113 = sbr.rel (%p1111) target = $region76
        $region75: #{tpu_custom_call.1} parent=51 // pred_region
          %s1115 = ssub.s32 128, 128
          %1116 = vsyncadd %s1107, %s1115
          %s1117 = sadd.s32 %s34, %s33
          %s1118 = smul.addr %s1117, 128
          %s1119 = scalar_lea.hbm %s8, %s1118
          %s1121 = sshll.u32 %s1110, 4
          %s1122 = int_to_ptr.vmem [resolvable:$true] %s1121
          %1124 = dma.vmem_to_hbm [thread:$0]  %s1122, 128, %s1119, %s1107
        $region76: #{tpu_custom_call.1} parent=51 // pred_fallthru
          _
      $region52: #{tpu_custom_call.1} parent=5 // pred_fallthru
        _
      %p1125 = scmp.le.s32.totalorder 2, %s24
      // Predicated region
      $region77: #{tpu_custom_call.1} parent=5 // pred_check
        %p1126 = pneg %p1125
      $region78: #{tpu_custom_call.1} parent=5 // pred_check_branch
        %1128 = sbr.rel (%p1126) target = $region80
      $region79: #{tpu_custom_call.1} parent=5 // pred_region
        %s1129 = ssub.s32 %s24, 2
        // Predicated region
        $region81: #{tpu_custom_call.1} parent=79 // pred_check
          %p1130 = pneg %p247
        $region82: #{tpu_custom_call.1} parent=79 // pred_check_branch
          %1132 = sbr.rel (%p1130) target = $region84
        $region83: #{tpu_custom_call.1} parent=79 // pred_region
          %s1133 = sand.u32 %s232, 1
          %s1134 = scalar_lea.sflag [#allocation6], %s1133
          %s1135 = sand.u32 %s232, 1
          %s1136 = smul.addr %s1135, 8
          %s1137 = scalar_lea.vmem [#allocation12], %s1136
          %1138 = dma.done %s1134, 128
        $region84: #{tpu_custom_call.1} parent=79 // pred_fallthru
          _
      $region80: #{tpu_custom_call.1} parent=5 // pred_fallthru
        _
    $region6: #{tpu_custom_call.1} parent=1 // loop_footer
      %s28 = sadd.s32 1, %s24
    $region7: #{tpu_custom_call.1} parent=1 // loop_footer_branch
      %23 = sbr.rel target = $region3
    $region8: #{tpu_custom_call.1} parent=1 // loop_exit
      _
    %1139 = vsyncpa [#allocation5], 1
    %s1140 = scalar_lea.sflag [#allocation5], 1
    %1141 = vsyncpa %s1140, 1
    %1142 = vsyncpa [#allocation8], 1
    %s1143 = scalar_lea.sflag [#allocation8], 1
    %1144 = vsyncpa %s1143, 1
    %1145 = vsyncpa [#allocation11], 1
    %1146 = vsyncpa [#allocation6], 1
    %s1147 = scalar_lea.sflag [#allocation6], 1
    %1148 = vsyncpa %s1147, 1

</llo_original>
